<compile_context>
chip_gen: v7x
topology: tpu7x:2x2x1
jax: 0.10.0
libtpu: 0.0.40
codegen_flags: <defaults>
</compile_context>

<pallas_src>
import functools

import jax
import jax.numpy as jnp
from jax import lax
from jax.experimental import pallas as pl
from jax.experimental.pallas import tpu as pltpu

HIDDEN = 64  # fixed by the module (embedding_dim = lstm hidden = 64)


def _multi_input_kernel(T, Tt,
                        emb_ref,      # (Tt, Bb, 64) bf16  time-major chunk
                        wih_ref,      # (64, 256)    bf16  W_ih^T (gates i,f,g,o)
                        whh_ref,      # (64, 256)    bf16  W_hh^T
                        b_ref,        # (1, 256)     f32   b_ih + b_hh
                        struct_ref,   # (Bb, struct_dim) f32
                        ws_ref,       # (struct_dim, 64) f32  struct_fc W^T
                        bs_ref,       # (1, 64)      f32
                        wc1a_ref,     # (64, 64)     f32   combined_fc W^T, text half
                        wc1b_ref,     # (64, 64)     f32   combined_fc W^T, struct half
                        bc1_ref,      # (1, 64)      f32
                        wc2_ref,      # (1, 64)      f32   final linear as a row
                        bc2_ref,      # (1, 1)       f32
                        out_ref,      # (Bb, 1)      f32
                        xw_scr,       # VMEM (Tt*Bb, 256) f32  hoisted x @ W_ih
                        h_scr,        # VMEM (Bb, 64) f32
                        c_scr):       # VMEM (Bb, 64) f32
    H = HIDDEN
    t_chunk = pl.program_id(1)
    Bb = emb_ref.shape[1]

    @pl.when(t_chunk == 0)
    def _():
        h_scr[...] = jnp.zeros_like(h_scr)
        c_scr[...] = jnp.zeros_like(c_scr)

    # ---- hoisted input projection: one MXU-efficient matmul per chunk ----
    x2d = emb_ref[...].reshape(Tt * Bb, H)                       # bf16
    xw_scr[...] = (jnp.dot(x2d, wih_ref[...],
                           preferred_element_type=jnp.float32)
                   + b_ref[...])                                 # f32 accumulate

    whh = whh_ref[...]
    h0 = h_scr[...]
    c0 = c_scr[...]

    # ---- LSTM recurrence: only h @ W_hh + elementwise on the serial path ----
    def step(j, carry):
        h, c = carry
        off = pl.multiple_of(j * Bb, Bb)
        gates = xw_scr[pl.ds(off, Bb), :] + jnp.dot(
            h.astype(jnp.bfloat16), whh, preferred_element_type=jnp.float32)
        if_sig = jax.nn.sigmoid(gates[:, :2 * H])        # i|f fused (128 lanes)
        g_g = jnp.tanh(gates[:, 2 * H:3 * H])
        o_g = jax.nn.sigmoid(gates[:, 3 * H:])
        c_new = if_sig[:, H:2 * H] * c + if_sig[:, :H] * g_g
        h_new = o_g * jnp.tanh(c_new)
        if T % Tt != 0:                                  # mask padded tail steps
            valid = (t_chunk * Tt + j) < T
            h_new = jnp.where(valid, h_new, h)
            c_new = jnp.where(valid, c_new, c)
        return h_new, c_new

    h_fin, c_fin = lax.fori_loop(0, Tt, step, (h0, c0), unroll=min(Tt, 8))
    h_scr[...] = h_fin
    c_scr[...] = c_fin

    # ---- epilogue: struct branch + combined head (Dropout = identity, eval) ----
    @pl.when(t_chunk == pl.num_programs(1) - 1)
    def _():
        struct_feat = jnp.maximum(
            jnp.dot(struct_ref[...], ws_ref[...],
                    preferred_element_type=jnp.float32) + bs_ref[...], 0.0)
        # concat(text, struct) @ W_c1^T  ==  text @ W_c1a + struct @ W_c1b
        hidden = jnp.maximum(
            jnp.dot(h_fin, wc1a_ref[...], preferred_element_type=jnp.float32)
            + jnp.dot(struct_feat, wc1b_ref[...],
                      preferred_element_type=jnp.float32)
            + bc1_ref[...], 0.0)
        # final (64 -> 1) projection as VPU multiply + lane reduce
        out_ref[...] = (jnp.sum(hidden * wc2_ref[...], axis=1, keepdims=True)
                        + bc2_ref[...])


def init_params(key, vocab_size, struct_dim):
    ks = jax.random.split(key, 10)
    s = 0.1
    emb = jax.random.normal(ks[0], (vocab_size, HIDDEN), jnp.float32) * s
    emb = emb.at[0].set(0.0)  # padding_idx=0
    return dict(
        embedding=emb,
        w_ih=jax.random.normal(ks[1], (4 * HIDDEN, HIDDEN), jnp.float32) * s,
        w_hh=jax.random.normal(ks[2], (4 * HIDDEN, HIDDEN), jnp.float32) * s,
        b_ih=jax.random.normal(ks[3], (4 * HIDDEN,), jnp.float32) * s,
        b_hh=jax.random.normal(ks[4], (4 * HIDDEN,), jnp.float32) * s,
        w_struct=jax.random.normal(ks[5], (HIDDEN, struct_dim), jnp.float32) * s,
        b_struct=jax.random.normal(ks[6], (HIDDEN,), jnp.float32) * s,
        w_c1=jax.random.normal(ks[7], (HIDDEN, 2 * HIDDEN), jnp.float32) * s,
        b_c1=jax.random.normal(ks[8], (HIDDEN,), jnp.float32) * s,
        w_c2=jax.random.normal(ks[9], (1, HIDDEN), jnp.float32) * s,
        b_c2=jnp.zeros((1,), jnp.float32),
    )


def multi_input_model(params, text_input, struct_input):
    """text_input: (B, T) int; struct_input: (B, struct_dim) f32 -> torch .squeeze() result."""
    B, T = text_input.shape
    struct_dim = struct_input.shape[1]
    H = HIDDEN

    # --- pad batch to a multiple of 16 (bf16 sublane packing) ---
    Bp = ((B + 15) // 16) * 16
    ids = text_input.astype(jnp.int32)
    struct_f = struct_input.astype(jnp.float32)
    if Bp != B:
        ids = jnp.pad(ids, ((0, Bp - B), (0, 0)))          # pad with token id 0
        struct_f = jnp.pad(struct_f, ((0, Bp - B), (0, 0)))

    # --- batch / time blocking ---
    Bb = 128 if (Bp % 128 == 0) else Bp                    # megacore batch split on v7x
    n_b = Bp // Bb
    Tt = min(T, max(8, 2048 // Bb))                        # ~1-2 MiB hoisted-proj scratch
    n_t = pl.cdiv(T, Tt)

    # --- embedding gather directly in time-major order (no (B,T,64) HBM transpose) ---
    emb_tab = params["embedding"].astype(jnp.bfloat16)
    embedded = jnp.take(emb_tab, ids.T, axis=0)            # (T, Bp, 64) bf16

    # --- weights, pre-transposed / pre-split for the kernel ---
    wih_t = params["w_ih"].T.astype(jnp.bfloat16)          # (64, 256)
    whh_t = params["w_hh"].T.astype(jnp.bfloat16)          # (64, 256)
    b_lstm = (params["b_ih"] + params["b_hh"]).reshape(1, 4 * H).astype(jnp.float32)
    ws_t = params["w_struct"].T.astype(jnp.float32)        # (struct_dim, 64)
    bs = params["b_struct"].reshape(1, H).astype(jnp.float32)
    wc1_t = params["w_c1"].T.astype(jnp.float32)           # (128, 64)
    wc1a, wc1b = wc1_t[:H], wc1_t[H:]                      # avoid in-kernel concat
    bc1 = params["b_c1"].reshape(1, H).astype(jnp.float32)
    wc2_row = params["w_c2"].reshape(1, H).astype(jnp.float32)
    bc2 = params["b_c2"].reshape(1, 1).astype(jnp.float32)

    const = lambda b, t: (0, 0)
    out = pl.pallas_call(
        functools.partial(_multi_input_kernel, T, Tt),
        out_shape=jax.ShapeDtypeStruct((Bp, 1), jnp.float32),
        grid=(n_b, n_t),
        in_specs=[
            pl.BlockSpec((Tt, Bb, H), lambda b, t: (t, b, 0)),     # embedded chunk
            pl.BlockSpec((H, 4 * H), const),                       # W_ih^T
            pl.BlockSpec((H, 4 * H), const),                       # W_hh^T
            pl.BlockSpec((1, 4 * H), const),                       # lstm bias
            pl.BlockSpec((Bb, struct_dim), lambda b, t: (b, 0)),   # struct input
            pl.BlockSpec((struct_dim, H), const),                  # struct W^T
            pl.BlockSpec((1, H), const),                           # struct b
            pl.BlockSpec((H, H), const),                           # W_c1 text half
            pl.BlockSpec((H, H), const),                           # W_c1 struct half
            pl.BlockSpec((1, H), const),                           # b_c1
            pl.BlockSpec((1, H), const),                           # W_c2 row
            pl.BlockSpec((1, 1), const),                           # b_c2
        ],
        out_specs=pl.BlockSpec((Bb, 1), lambda b, t: (b, 0)),
        scratch_shapes=[
            pltpu.VMEM((Tt * Bb, 4 * H), jnp.float32),  # hoisted x @ W_ih chunk
            pltpu.VMEM((Bb, H), jnp.float32),           # h state (persists over t)
            pltpu.VMEM((Bb, H), jnp.float32),           # c state (persists over t)
        ],
        compiler_params=pltpu.CompilerParams(
            dimension_semantics=("parallel", "arbitrary")),
    )(embedded, wih_t, whh_t, b_lstm, struct_f, ws_t, bs,
      wc1a, wc1b, bc1, wc2_row, bc2)

    # TODO(synk): Dropout layers are identity here (eval-mode semantics).
    # torch .squeeze(): (B,) for B > 1, 0-d scalar for B == 1
    return jnp.squeeze(out[:B])


def _reference(params, text_input, struct_input):
    """Pure-JAX f32 reference of the PyTorch forward (eval mode)."""
    H = HIDDEN
    emb = jnp.take(params["embedding"], text_input, axis=0)       # (B, T, H)
    B, T, _ = emb.shape
    h = jnp.zeros((B, H), jnp.float32)
    c = jnp.zeros((B, H), jnp.float32)
    bias = params["b_ih"] + params["b_hh"]
    for t in range(T):
        g = emb[:, t] @ params["w_ih"].T + h @ params["w_hh"].T + bias
        i = jax.nn.sigmoid(g[:, :H]); f = jax.nn.sigmoid(g[:, H:2 * H])
        gg = jnp.tanh(g[:, 2 * H:3 * H]); o = jax.nn.sigmoid(g[:, 3 * H:])
        c = f * c + i * gg
        h = o * jnp.tanh(c)
    sf = jax.nn.relu(struct_input @ params["w_struct"].T + params["b_struct"])
    comb = jnp.concatenate([h, sf], axis=1)
    hid = jax.nn.relu(comb @ params["w_c1"].T + params["b_c1"])
    return jnp.squeeze(hid @ params["w_c2"].T + params["b_c2"])


if __name__ == "__main__":
    key = jax.random.PRNGKey(0)
    vocab_size, struct_dim = 32, 16
    B, T = 2, 8

    pkey, tkey, skey = jax.random.split(key, 3)
    params = init_params(pkey, vocab_size, struct_dim)

    text_input = jax.random.randint(tkey, (B, T), 0, vocab_size, dtype=jnp.int32)
    struct_input = jax.random.normal(skey, (B, struct_dim), jnp.float32)

    result = multi_input_model(params, text_input, struct_input)
    jax.block_until_ready(result)
    assert result.shape == (B,)

    ref = _reference(params, text_input, struct_input)
    assert jnp.allclose(result, ref, atol=5e-2, rtol=5e-2), (result, ref)

    print("KERNEL_OK")
</pallas_src>

<mosaic_0001>
module attributes {stable_mosaic.version = 11 : i64} {
  func.func @_multi_input_kernel(%arg0: i32, %arg1: i32, %arg2: memref<8x16x64xbf16, #tpu.memory_space<vmem>>, %arg3: memref<64x256xbf16, #tpu.memory_space<vmem>>, %arg4: memref<64x256xbf16, #tpu.memory_space<vmem>>, %arg5: memref<1x256xf32, #tpu.memory_space<vmem>>, %arg6: memref<16x16xf32, #tpu.memory_space<vmem>>, %arg7: memref<16x64xf32, #tpu.memory_space<vmem>>, %arg8: memref<1x64xf32, #tpu.memory_space<vmem>>, %arg9: memref<64x64xf32, #tpu.memory_space<vmem>>, %arg10: memref<64x64xf32, #tpu.memory_space<vmem>>, %arg11: memref<1x64xf32, #tpu.memory_space<vmem>>, %arg12: memref<1x64xf32, #tpu.memory_space<vmem>>, %arg13: memref<1x1xf32, #tpu.memory_space<vmem>>, %arg14: memref<16x1xf32, #tpu.memory_space<vmem>>, %arg15: memref<128x256xf32, #tpu.memory_space<vmem>>, %arg16: memref<16x64xf32, #tpu.memory_space<vmem>>, %arg17: memref<16x64xf32, #tpu.memory_space<vmem>>) attributes {dimension_semantics = [#tpu.dimension_semantics<parallel>, #tpu.dimension_semantics<arbitrary>], iteration_bounds = array<i64: 1, 1>, scalar_prefetch = 0 : i64, scratch_operands = 3 : i64, tpu.core_type = #tpu.core_type<tc>, window_params = [{transform_indices = @transform_0, window_bounds = array<i64: 8, 16, 64>}, {pipeline_mode = #tpu.pipeline_mode<synchronous>, transform_indices = @transform_1, window_bounds = array<i64: 64, 256>}, {pipeline_mode = #tpu.pipeline_mode<synchronous>, transform_indices = @transform_2, window_bounds = array<i64: 64, 256>}, {pipeline_mode = #tpu.pipeline_mode<synchronous>, transform_indices = @transform_3, window_bounds = array<i64: 1, 256>}, {transform_indices = @transform_4, window_bounds = array<i64: 16, 16>}, {pipeline_mode = #tpu.pipeline_mode<synchronous>, transform_indices = @transform_5, window_bounds = array<i64: 16, 64>}, {pipeline_mode = #tpu.pipeline_mode<synchronous>, transform_indices = @transform_6, window_bounds = array<i64: 1, 64>}, {pipeline_mode = #tpu.pipeline_mode<synchronous>, transform_indices = @transform_7, window_bounds = array<i64: 64, 64>}, {pipeline_mode = #tpu.pipeline_mode<synchronous>, transform_indices = @transform_8, window_bounds = array<i64: 64, 64>}, {pipeline_mode = #tpu.pipeline_mode<synchronous>, transform_indices = @transform_9, window_bounds = array<i64: 1, 64>}, {pipeline_mode = #tpu.pipeline_mode<synchronous>, transform_indices = @transform_10, window_bounds = array<i64: 1, 64>}, {pipeline_mode = #tpu.pipeline_mode<synchronous>, transform_indices = @transform_11, window_bounds = array<i64: 1, 1>}, {transform_indices = @transform_12, window_bounds = array<i64: 16, 1>}]} {
    %c0_i32 = arith.constant 0 : i32
    %0 = arith.cmpi eq, %arg1, %c0_i32 : i32
    %1 = arith.extui %0 : i1 to i32
    %c0_i32_0 = arith.constant 0 : i32
    %2 = arith.cmpi ne, %1, %c0_i32_0 : i32
    scf.if %2 {
      %cst_61 = arith.constant 0.000000e+00 : f32
      %243 = vector.broadcast %cst_61 : f32 to vector<16x64xf32>
      %c0_62 = arith.constant 0 : index
      %c0_63 = arith.constant 0 : index
      %244 = vector.load %arg16[%c0_62, %c0_63] : memref<16x64xf32, #tpu.memory_space<vmem>>, vector<16x64xf32>
      tpu.vector_store %arg16[%c0_62, %c0_63], %243 {strides = array<i32>} : memref<16x64xf32, #tpu.memory_space<vmem>>, vector<16x64xf32>,
      %cst_64 = arith.constant 0.000000e+00 : f32
      %245 = vector.broadcast %cst_64 : f32 to vector<16x64xf32>
      %c0_65 = arith.constant 0 : index
      %c0_66 = arith.constant 0 : index
      %246 = vector.load %arg17[%c0_65, %c0_66] : memref<16x64xf32, #tpu.memory_space<vmem>>, vector<16x64xf32>
      tpu.vector_store %arg17[%c0_65, %c0_66], %245 {strides = array<i32>} : memref<16x64xf32, #tpu.memory_space<vmem>>, vector<16x64xf32>,
    } else {
    }
    %c0 = arith.constant 0 : index
    %c0_1 = arith.constant 0 : index
    %c0_2 = arith.constant 0 : index
    %3 = vector.load %arg2[%c0, %c0_1, %c0_2] : memref<8x16x64xbf16, #tpu.memory_space<vmem>>, vector<8x16x64xbf16>
    %4 = vector.shape_cast %3 : vector<8x16x64xbf16> to vector<128x64xbf16>
    %c0_3 = arith.constant 0 : index
    %c0_4 = arith.constant 0 : index
    %5 = vector.load %arg3[%c0_3, %c0_4] : memref<64x256xbf16, #tpu.memory_space<vmem>>, vector<64x256xbf16>
    %cst = arith.constant dense<0.000000e+00> : vector<128x256xf32>
    %6 = tpu.matmul %4, %5, %cst {dimension_numbers = #tpu.dot_dimension_numbers<[1], [0], [0], [1], [0, 0, 1, 1], [], []>} : vector<128x64xbf16>, vector<64x256xbf16>, vector<128x256xf32> -> vector<128x256xf32>
    %c0_5 = arith.constant 0 : index
    %c0_6 = arith.constant 0 : index
    %7 = vector.load %arg5[%c0_5, %c0_6] : memref<1x256xf32, #tpu.memory_space<vmem>>, vector<1x256xf32>
    %8 = vector.broadcast %7 : vector<1x256xf32> to vector<128x256xf32>
    %9 = arith.addf %6, %8 : vector<128x256xf32>
    %c0_7 = arith.constant 0 : index
    %c0_8 = arith.constant 0 : index
    %10 = vector.load %arg15[%c0_7, %c0_8] : memref<128x256xf32, #tpu.memory_space<vmem>>, vector<128x256xf32>
    tpu.vector_store %arg15[%c0_7, %c0_8], %9 {strides = array<i32>} : memref<128x256xf32, #tpu.memory_space<vmem>>, vector<128x256xf32>,
    %c0_9 = arith.constant 0 : index
    %c0_10 = arith.constant 0 : index
    %11 = vector.load %arg4[%c0_9, %c0_10] : memref<64x256xbf16, #tpu.memory_space<vmem>>, vector<64x256xbf16>
    %c0_11 = arith.constant 0 : index
    %c0_12 = arith.constant 0 : index
    %12 = vector.load %arg16[%c0_11, %c0_12] : memref<16x64xf32, #tpu.memory_space<vmem>>, vector<16x64xf32>
    %c0_13 = arith.constant 0 : index
    %c0_14 = arith.constant 0 : index
    %13 = vector.load %arg17[%c0_13, %c0_14] : memref<16x64xf32, #tpu.memory_space<vmem>>, vector<16x64xf32>
    %c0_i32_15 = arith.constant 0 : i32
    %c16_i32 = arith.constant 16 : i32
    %14 = arith.muli %c0_i32_15, %c16_i32 : i32
    %15 = tpu.assume_multiple %14, 16 : i32
    %16 = arith.index_cast %15 : i32 to index
    %c0_16 = arith.constant 0 : index
    %17 = vector.load %arg15[%16, %c0_16] : memref<128x256xf32, #tpu.memory_space<vmem>>, vector<16x256xf32>
    %18 = arith.truncf %12 : vector<16x64xf32> to vector<16x64xbf16>
    %cst_17 = arith.constant dense<0.000000e+00> : vector<16x256xf32>
    %19 = tpu.matmul %18, %11, %cst_17 {dimension_numbers = #tpu.dot_dimension_numbers<[1], [0], [0], [1], [0, 0, 1, 1], [], []>} : vector<16x64xbf16>, vector<64x256xbf16>, vector<16x256xf32> -> vector<16x256xf32>
    %20 = arith.addf %17, %19 : vector<16x256xf32>
    %21 = vector.extract_strided_slice %20 {offsets = [0, 0], sizes = [16, 128], strides = [1, 1]} : vector<16x256xf32> to vector<16x128xf32>
    %22 = arith.negf %21 : vector<16x128xf32>
    %23 = math.exp %22 : vector<16x128xf32>
    %cst_18 = arith.constant 1.000000e+00 : f32
    %24 = vector.broadcast %cst_18 : f32 to vector<16x128xf32>
    %25 = arith.addf %24, %23 : vector<16x128xf32>
    %26 = arith.divf %24, %25 : vector<16x128xf32>
    %27 = vector.extract_strided_slice %20 {offsets = [0, 128], sizes = [16, 64], strides = [1, 1]} : vector<16x256xf32> to vector<16x64xf32>
    %28 = math.tanh %27 : vector<16x64xf32>
    %29 = vector.extract_strided_slice %20 {offsets = [0, 192], sizes = [16, 64], strides = [1, 1]} : vector<16x256xf32> to vector<16x64xf32>
    %30 = arith.negf %29 : vector<16x64xf32>
    %31 = math.exp %30 : vector<16x64xf32>
    %cst_19 = arith.constant 1.000000e+00 : f32
    %32 = vector.broadcast %cst_19 : f32 to vector<16x64xf32>
    %33 = arith.addf %32, %31 : vector<16x64xf32>
    %34 = arith.divf %32, %33 : vector<16x64xf32>
    %35 = vector.extract_strided_slice %26 {offsets = [0, 64], sizes = [16, 64], strides = [1, 1]} : vector<16x128xf32> to vector<16x64xf32>
    %36 = arith.mulf %35, %13 : vector<16x64xf32>
    %37 = vector.extract_strided_slice %26 {offsets = [0, 0], sizes = [16, 64], strides = [1, 1]} : vector<16x128xf32> to vector<16x64xf32>
    %38 = arith.mulf %37, %28 : vector<16x64xf32>
    %39 = arith.addf %36, %38 : vector<16x64xf32>
    %40 = math.tanh %39 : vector<16x64xf32>
    %41 = arith.mulf %34, %40 : vector<16x64xf32>
    %c1_i32 = arith.constant 1 : i32
    %c16_i32_20 = arith.constant 16 : i32
    %42 = arith.muli %c1_i32, %c16_i32_20 : i32
    %43 = tpu.assume_multiple %42, 16 : i32
    %44 = arith.index_cast %43 : i32 to index
    %c0_21 = arith.constant 0 : index
    %45 = vector.load %arg15[%44, %c0_21] : memref<128x256xf32, #tpu.memory_space<vmem>>, vector<16x256xf32>
    %46 = arith.truncf %41 : vector<16x64xf32> to vector<16x64xbf16>
    %cst_22 = arith.constant dense<0.000000e+00> : vector<16x256xf32>
    %47 = tpu.matmul %46, %11, %cst_22 {dimension_numbers = #tpu.dot_dimension_numbers<[1], [0], [0], [1], [0, 0, 1, 1], [], []>} : vector<16x64xbf16>, vector<64x256xbf16>, vector<16x256xf32> -> vector<16x256xf32>
    %48 = arith.addf %45, %47 : vector<16x256xf32>
    %49 = vector.extract_strided_slice %48 {offsets = [0, 0], sizes = [16, 128], strides = [1, 1]} : vector<16x256xf32> to vector<16x128xf32>
    %50 = arith.negf %49 : vector<16x128xf32>
    %51 = math.exp %50 : vector<16x128xf32>
    %cst_23 = arith.constant 1.000000e+00 : f32
    %52 = vector.broadcast %cst_23 : f32 to vector<16x128xf32>
    %53 = arith.addf %52, %51 : vector<16x128xf32>
    %54 = arith.divf %52, %53 : vector<16x128xf32>
    %55 = vector.extract_strided_slice %48 {offsets = [0, 128], sizes = [16, 64], strides = [1, 1]} : vector<16x256xf32> to vector<16x64xf32>
    %56 = math.tanh %55 : vector<16x64xf32>
    %57 = vector.extract_strided_slice %48 {offsets = [0, 192], sizes = [16, 64], strides = [1, 1]} : vector<16x256xf32> to vector<16x64xf32>
    %58 = arith.negf %57 : vector<16x64xf32>
    %59 = math.exp %58 : vector<16x64xf32>
    %cst_24 = arith.constant 1.000000e+00 : f32
    %60 = vector.broadcast %cst_24 : f32 to vector<16x64xf32>
    %61 = arith.addf %60, %59 : vector<16x64xf32>
    %62 = arith.divf %60, %61 : vector<16x64xf32>
    %63 = vector.extract_strided_slice %54 {offsets = [0, 64], sizes = [16, 64], strides = [1, 1]} : vector<16x128xf32> to vector<16x64xf32>
    %64 = arith.mulf %63, %39 : vector<16x64xf32>
    %65 = vector.extract_strided_slice %54 {offsets = [0, 0], sizes = [16, 64], strides = [1, 1]} : vector<16x128xf32> to vector<16x64xf32>
    %66 = arith.mulf %65, %56 : vector<16x64xf32>
    %67 = arith.addf %64, %66 : vector<16x64xf32>
    %68 = math.tanh %67 : vector<16x64xf32>
    %69 = arith.mulf %62, %68 : vector<16x64xf32>
    %c2_i32 = arith.constant 2 : i32
    %c16_i32_25 = arith.constant 16 : i32
    %70 = arith.muli %c2_i32, %c16_i32_25 : i32
    %71 = tpu.assume_multiple %70, 16 : i32
    %72 = arith.index_cast %71 : i32 to index
    %c0_26 = arith.constant 0 : index
    %73 = vector.load %arg15[%72, %c0_26] : memref<128x256xf32, #tpu.memory_space<vmem>>, vector<16x256xf32>
    %74 = arith.truncf %69 : vector<16x64xf32> to vector<16x64xbf16>
    %cst_27 = arith.constant dense<0.000000e+00> : vector<16x256xf32>
    %75 = tpu.matmul %74, %11, %cst_27 {dimension_numbers = #tpu.dot_dimension_numbers<[1], [0], [0], [1], [0, 0, 1, 1], [], []>} : vector<16x64xbf16>, vector<64x256xbf16>, vector<16x256xf32> -> vector<16x256xf32>
    %76 = arith.addf %73, %75 : vector<16x256xf32>
    %77 = vector.extract_strided_slice %76 {offsets = [0, 0], sizes = [16, 128], strides = [1, 1]} : vector<16x256xf32> to vector<16x128xf32>
    %78 = arith.negf %77 : vector<16x128xf32>
    %79 = math.exp %78 : vector<16x128xf32>
    %cst_28 = arith.constant 1.000000e+00 : f32
    %80 = vector.broadcast %cst_28 : f32 to vector<16x128xf32>
    %81 = arith.addf %80, %79 : vector<16x128xf32>
    %82 = arith.divf %80, %81 : vector<16x128xf32>
    %83 = vector.extract_strided_slice %76 {offsets = [0, 128], sizes = [16, 64], strides = [1, 1]} : vector<16x256xf32> to vector<16x64xf32>
    %84 = math.tanh %83 : vector<16x64xf32>
    %85 = vector.extract_strided_slice %76 {offsets = [0, 192], sizes = [16, 64], strides = [1, 1]} : vector<16x256xf32> to vector<16x64xf32>
    %86 = arith.negf %85 : vector<16x64xf32>
    %87 = math.exp %86 : vector<16x64xf32>
    %cst_29 = arith.constant 1.000000e+00 : f32
    %88 = vector.broadcast %cst_29 : f32 to vector<16x64xf32>
    %89 = arith.addf %88, %87 : vector<16x64xf32>
    %90 = arith.divf %88, %89 : vector<16x64xf32>
    %91 = vector.extract_strided_slice %82 {offsets = [0, 64], sizes = [16, 64], strides = [1, 1]} : vector<16x128xf32> to vector<16x64xf32>
    %92 = arith.mulf %91, %67 : vector<16x64xf32>
    %93 = vector.extract_strided_slice %82 {offsets = [0, 0], sizes = [16, 64], strides = [1, 1]} : vector<16x128xf32> to vector<16x64xf32>
    %94 = arith.mulf %93, %84 : vector<16x64xf32>
    %95 = arith.addf %92, %94 : vector<16x64xf32>
    %96 = math.tanh %95 : vector<16x64xf32>
    %97 = arith.mulf %90, %96 : vector<16x64xf32>
    %c3_i32 = arith.constant 3 : i32
    %c16_i32_30 = arith.constant 16 : i32
    %98 = arith.muli %c3_i32, %c16_i32_30 : i32
    %99 = tpu.assume_multiple %98, 16 : i32
    %100 = arith.index_cast %99 : i32 to index
    %c0_31 = arith.constant 0 : index
    %101 = vector.load %arg15[%100, %c0_31] : memref<128x256xf32, #tpu.memory_space<vmem>>, vector<16x256xf32>
    %102 = arith.truncf %97 : vector<16x64xf32> to vector<16x64xbf16>
    %cst_32 = arith.constant dense<0.000000e+00> : vector<16x256xf32>
    %103 = tpu.matmul %102, %11, %cst_32 {dimension_numbers = #tpu.dot_dimension_numbers<[1], [0], [0], [1], [0, 0, 1, 1], [], []>} : vector<16x64xbf16>, vector<64x256xbf16>, vector<16x256xf32> -> vector<16x256xf32>
    %104 = arith.addf %101, %103 : vector<16x256xf32>
    %105 = vector.extract_strided_slice %104 {offsets = [0, 0], sizes = [16, 128], strides = [1, 1]} : vector<16x256xf32> to vector<16x128xf32>
    %106 = arith.negf %105 : vector<16x128xf32>
    %107 = math.exp %106 : vector<16x128xf32>
    %cst_33 = arith.constant 1.000000e+00 : f32
    %108 = vector.broadcast %cst_33 : f32 to vector<16x128xf32>
    %109 = arith.addf %108, %107 : vector<16x128xf32>
    %110 = arith.divf %108, %109 : vector<16x128xf32>
    %111 = vector.extract_strided_slice %104 {offsets = [0, 128], sizes = [16, 64], strides = [1, 1]} : vector<16x256xf32> to vector<16x64xf32>
    %112 = math.tanh %111 : vector<16x64xf32>
    %113 = vector.extract_strided_slice %104 {offsets = [0, 192], sizes = [16, 64], strides = [1, 1]} : vector<16x256xf32> to vector<16x64xf32>
    %114 = arith.negf %113 : vector<16x64xf32>
    %115 = math.exp %114 : vector<16x64xf32>
    %cst_34 = arith.constant 1.000000e+00 : f32
    %116 = vector.broadcast %cst_34 : f32 to vector<16x64xf32>
    %117 = arith.addf %116, %115 : vector<16x64xf32>
    %118 = arith.divf %116, %117 : vector<16x64xf32>
    %119 = vector.extract_strided_slice %110 {offsets = [0, 64], sizes = [16, 64], strides = [1, 1]} : vector<16x128xf32> to vector<16x64xf32>
    %120 = arith.mulf %119, %95 : vector<16x64xf32>
    %121 = vector.extract_strided_slice %110 {offsets = [0, 0], sizes = [16, 64], strides = [1, 1]} : vector<16x128xf32> to vector<16x64xf32>
    %122 = arith.mulf %121, %112 : vector<16x64xf32>
    %123 = arith.addf %120, %122 : vector<16x64xf32>
    %124 = math.tanh %123 : vector<16x64xf32>
    %125 = arith.mulf %118, %124 : vector<16x64xf32>
    %c4_i32 = arith.constant 4 : i32
    %c16_i32_35 = arith.constant 16 : i32
    %126 = arith.muli %c4_i32, %c16_i32_35 : i32
    %127 = tpu.assume_multiple %126, 16 : i32
    %128 = arith.index_cast %127 : i32 to index
    %c0_36 = arith.constant 0 : index
    %129 = vector.load %arg15[%128, %c0_36] : memref<128x256xf32, #tpu.memory_space<vmem>>, vector<16x256xf32>
    %130 = arith.truncf %125 : vector<16x64xf32> to vector<16x64xbf16>
    %cst_37 = arith.constant dense<0.000000e+00> : vector<16x256xf32>
    %131 = tpu.matmul %130, %11, %cst_37 {dimension_numbers = #tpu.dot_dimension_numbers<[1], [0], [0], [1], [0, 0, 1, 1], [], []>} : vector<16x64xbf16>, vector<64x256xbf16>, vector<16x256xf32> -> vector<16x256xf32>
    %132 = arith.addf %129, %131 : vector<16x256xf32>
    %133 = vector.extract_strided_slice %132 {offsets = [0, 0], sizes = [16, 128], strides = [1, 1]} : vector<16x256xf32> to vector<16x128xf32>
    %134 = arith.negf %133 : vector<16x128xf32>
    %135 = math.exp %134 : vector<16x128xf32>
    %cst_38 = arith.constant 1.000000e+00 : f32
    %136 = vector.broadcast %cst_38 : f32 to vector<16x128xf32>
    %137 = arith.addf %136, %135 : vector<16x128xf32>
    %138 = arith.divf %136, %137 : vector<16x128xf32>
    %139 = vector.extract_strided_slice %132 {offsets = [0, 128], sizes = [16, 64], strides = [1, 1]} : vector<16x256xf32> to vector<16x64xf32>
    %140 = math.tanh %139 : vector<16x64xf32>
    %141 = vector.extract_strided_slice %132 {offsets = [0, 192], sizes = [16, 64], strides = [1, 1]} : vector<16x256xf32> to vector<16x64xf32>
    %142 = arith.negf %141 : vector<16x64xf32>
    %143 = math.exp %142 : vector<16x64xf32>
    %cst_39 = arith.constant 1.000000e+00 : f32
    %144 = vector.broadcast %cst_39 : f32 to vector<16x64xf32>
    %145 = arith.addf %144, %143 : vector<16x64xf32>
    %146 = arith.divf %144, %145 : vector<16x64xf32>
    %147 = vector.extract_strided_slice %138 {offsets = [0, 64], sizes = [16, 64], strides = [1, 1]} : vector<16x128xf32> to vector<16x64xf32>
    %148 = arith.mulf %147, %123 : vector<16x64xf32>
    %149 = vector.extract_strided_slice %138 {offsets = [0, 0], sizes = [16, 64], strides = [1, 1]} : vector<16x128xf32> to vector<16x64xf32>
    %150 = arith.mulf %149, %140 : vector<16x64xf32>
    %151 = arith.addf %148, %150 : vector<16x64xf32>
    %152 = math.tanh %151 : vector<16x64xf32>
    %153 = arith.mulf %146, %152 : vector<16x64xf32>
    %c5_i32 = arith.constant 5 : i32
    %c16_i32_40 = arith.constant 16 : i32
    %154 = arith.muli %c5_i32, %c16_i32_40 : i32
    %155 = tpu.assume_multiple %154, 16 : i32
    %156 = arith.index_cast %155 : i32 to index
    %c0_41 = arith.constant 0 : index
    %157 = vector.load %arg15[%156, %c0_41] : memref<128x256xf32, #tpu.memory_space<vmem>>, vector<16x256xf32>
    %158 = arith.truncf %153 : vector<16x64xf32> to vector<16x64xbf16>
    %cst_42 = arith.constant dense<0.000000e+00> : vector<16x256xf32>
    %159 = tpu.matmul %158, %11, %cst_42 {dimension_numbers = #tpu.dot_dimension_numbers<[1], [0], [0], [1], [0, 0, 1, 1], [], []>} : vector<16x64xbf16>, vector<64x256xbf16>, vector<16x256xf32> -> vector<16x256xf32>
    %160 = arith.addf %157, %159 : vector<16x256xf32>
    %161 = vector.extract_strided_slice %160 {offsets = [0, 0], sizes = [16, 128], strides = [1, 1]} : vector<16x256xf32> to vector<16x128xf32>
    %162 = arith.negf %161 : vector<16x128xf32>
    %163 = math.exp %162 : vector<16x128xf32>
    %cst_43 = arith.constant 1.000000e+00 : f32
    %164 = vector.broadcast %cst_43 : f32 to vector<16x128xf32>
    %165 = arith.addf %164, %163 : vector<16x128xf32>
    %166 = arith.divf %164, %165 : vector<16x128xf32>
    %167 = vector.extract_strided_slice %160 {offsets = [0, 128], sizes = [16, 64], strides = [1, 1]} : vector<16x256xf32> to vector<16x64xf32>
    %168 = math.tanh %167 : vector<16x64xf32>
    %169 = vector.extract_strided_slice %160 {offsets = [0, 192], sizes = [16, 64], strides = [1, 1]} : vector<16x256xf32> to vector<16x64xf32>
    %170 = arith.negf %169 : vector<16x64xf32>
    %171 = math.exp %170 : vector<16x64xf32>
    %cst_44 = arith.constant 1.000000e+00 : f32
    %172 = vector.broadcast %cst_44 : f32 to vector<16x64xf32>
    %173 = arith.addf %172, %171 : vector<16x64xf32>
    %174 = arith.divf %172, %173 : vector<16x64xf32>
    %175 = vector.extract_strided_slice %166 {offsets = [0, 64], sizes = [16, 64], strides = [1, 1]} : vector<16x128xf32> to vector<16x64xf32>
    %176 = arith.mulf %175, %151 : vector<16x64xf32>
    %177 = vector.extract_strided_slice %166 {offsets = [0, 0], sizes = [16, 64], strides = [1, 1]} : vector<16x128xf32> to vector<16x64xf32>
    %178 = arith.mulf %177, %168 : vector<16x64xf32>
    %179 = arith.addf %176, %178 : vector<16x64xf32>
    %180 = math.tanh %179 : vector<16x64xf32>
    %181 = arith.mulf %174, %180 : vector<16x64xf32>
    %c6_i32 = arith.constant 6 : i32
    %c16_i32_45 = arith.constant 16 : i32
    %182 = arith.muli %c6_i32, %c16_i32_45 : i32
    %183 = tpu.assume_multiple %182, 16 : i32
    %184 = arith.index_cast %183 : i32 to index
    %c0_46 = arith.constant 0 : index
    %185 = vector.load %arg15[%184, %c0_46] : memref<128x256xf32, #tpu.memory_space<vmem>>, vector<16x256xf32>
    %186 = arith.truncf %181 : vector<16x64xf32> to vector<16x64xbf16>
    %cst_47 = arith.constant dense<0.000000e+00> : vector<16x256xf32>
    %187 = tpu.matmul %186, %11, %cst_47 {dimension_numbers = #tpu.dot_dimension_numbers<[1], [0], [0], [1], [0, 0, 1, 1], [], []>} : vector<16x64xbf16>, vector<64x256xbf16>, vector<16x256xf32> -> vector<16x256xf32>
    %188 = arith.addf %185, %187 : vector<16x256xf32>
    %189 = vector.extract_strided_slice %188 {offsets = [0, 0], sizes = [16, 128], strides = [1, 1]} : vector<16x256xf32> to vector<16x128xf32>
    %190 = arith.negf %189 : vector<16x128xf32>
    %191 = math.exp %190 : vector<16x128xf32>
    %cst_48 = arith.constant 1.000000e+00 : f32
    %192 = vector.broadcast %cst_48 : f32 to vector<16x128xf32>
    %193 = arith.addf %192, %191 : vector<16x128xf32>
    %194 = arith.divf %192, %193 : vector<16x128xf32>
    %195 = vector.extract_strided_slice %188 {offsets = [0, 128], sizes = [16, 64], strides = [1, 1]} : vector<16x256xf32> to vector<16x64xf32>
    %196 = math.tanh %195 : vector<16x64xf32>
    %197 = vector.extract_strided_slice %188 {offsets = [0, 192], sizes = [16, 64], strides = [1, 1]} : vector<16x256xf32> to vector<16x64xf32>
    %198 = arith.negf %197 : vector<16x64xf32>
    %199 = math.exp %198 : vector<16x64xf32>
    %cst_49 = arith.constant 1.000000e+00 : f32
    %200 = vector.broadcast %cst_49 : f32 to vector<16x64xf32>
    %201 = arith.addf %200, %199 : vector<16x64xf32>
    %202 = arith.divf %200, %201 : vector<16x64xf32>
    %203 = vector.extract_strided_slice %194 {offsets = [0, 64], sizes = [16, 64], strides = [1, 1]} : vector<16x128xf32> to vector<16x64xf32>
    %204 = arith.mulf %203, %179 : vector<16x64xf32>
    %205 = vector.extract_strided_slice %194 {offsets = [0, 0], sizes = [16, 64], strides = [1, 1]} : vector<16x128xf32> to vector<16x64xf32>
    %206 = arith.mulf %205, %196 : vector<16x64xf32>
    %207 = arith.addf %204, %206 : vector<16x64xf32>
    %208 = math.tanh %207 : vector<16x64xf32>
    %209 = arith.mulf %202, %208 : vector<16x64xf32>
    %c7_i32 = arith.constant 7 : i32
    %c16_i32_50 = arith.constant 16 : i32
    %210 = arith.muli %c7_i32, %c16_i32_50 : i32
    %211 = tpu.assume_multiple %210, 16 : i32
    %212 = arith.index_cast %211 : i32 to index
    %c0_51 = arith.constant 0 : index
    %213 = vector.load %arg15[%212, %c0_51] : memref<128x256xf32, #tpu.memory_space<vmem>>, vector<16x256xf32>
    %214 = arith.truncf %209 : vector<16x64xf32> to vector<16x64xbf16>
    %cst_52 = arith.constant dense<0.000000e+00> : vector<16x256xf32>
    %215 = tpu.matmul %214, %11, %cst_52 {dimension_numbers = #tpu.dot_dimension_numbers<[1], [0], [0], [1], [0, 0, 1, 1], [], []>} : vector<16x64xbf16>, vector<64x256xbf16>, vector<16x256xf32> -> vector<16x256xf32>
    %216 = arith.addf %213, %215 : vector<16x256xf32>
    %217 = vector.extract_strided_slice %216 {offsets = [0, 0], sizes = [16, 128], strides = [1, 1]} : vector<16x256xf32> to vector<16x128xf32>
    %218 = arith.negf %217 : vector<16x128xf32>
    %219 = math.exp %218 : vector<16x128xf32>
    %cst_53 = arith.constant 1.000000e+00 : f32
    %220 = vector.broadcast %cst_53 : f32 to vector<16x128xf32>
    %221 = arith.addf %220, %219 : vector<16x128xf32>
    %222 = arith.divf %220, %221 : vector<16x128xf32>
    %223 = vector.extract_strided_slice %216 {offsets = [0, 128], sizes = [16, 64], strides = [1, 1]} : vector<16x256xf32> to vector<16x64xf32>
    %224 = math.tanh %223 : vector<16x64xf32>
    %225 = vector.extract_strided_slice %216 {offsets = [0, 192], sizes = [16, 64], strides = [1, 1]} : vector<16x256xf32> to vector<16x64xf32>
    %226 = arith.negf %225 : vector<16x64xf32>
    %227 = math.exp %226 : vector<16x64xf32>
    %cst_54 = arith.constant 1.000000e+00 : f32
    %228 = vector.broadcast %cst_54 : f32 to vector<16x64xf32>
    %229 = arith.addf %228, %227 : vector<16x64xf32>
    %230 = arith.divf %228, %229 : vector<16x64xf32>
    %231 = vector.extract_strided_slice %222 {offsets = [0, 64], sizes = [16, 64], strides = [1, 1]} : vector<16x128xf32> to vector<16x64xf32>
    %232 = arith.mulf %231, %207 : vector<16x64xf32>
    %233 = vector.extract_strided_slice %222 {offsets = [0, 0], sizes = [16, 64], strides = [1, 1]} : vector<16x128xf32> to vector<16x64xf32>
    %234 = arith.mulf %233, %224 : vector<16x64xf32>
    %235 = arith.addf %232, %234 : vector<16x64xf32>
    %236 = math.tanh %235 : vector<16x64xf32>
    %237 = arith.mulf %230, %236 : vector<16x64xf32>
    %c8_i32 = arith.constant 8 : i32
    %c0_55 = arith.constant 0 : index
    %c0_56 = arith.constant 0 : index
    %238 = vector.load %arg16[%c0_55, %c0_56] : memref<16x64xf32, #tpu.memory_space<vmem>>, vector<16x64xf32>
    tpu.vector_store %arg16[%c0_55, %c0_56], %237 {strides = array<i32>} : memref<16x64xf32, #tpu.memory_space<vmem>>, vector<16x64xf32>,
    %c0_57 = arith.constant 0 : index
    %c0_58 = arith.constant 0 : index
    %239 = vector.load %arg17[%c0_57, %c0_58] : memref<16x64xf32, #tpu.memory_space<vmem>>, vector<16x64xf32>
    tpu.vector_store %arg17[%c0_57, %c0_58], %235 {strides = array<i32>} : memref<16x64xf32, #tpu.memory_space<vmem>>, vector<16x64xf32>,
    %c0_i32_59 = arith.constant 0 : i32
    %240 = arith.cmpi eq, %arg1, %c0_i32_59 : i32
    %241 = arith.extui %240 : i1 to i32
    %c0_i32_60 = arith.constant 0 : i32
    %242 = arith.cmpi ne, %241, %c0_i32_60 : i32
    scf.if %242 {
      %c0_61 = arith.constant 0 : index
      %c0_62 = arith.constant 0 : index
      %243 = vector.load %arg6[%c0_61, %c0_62] : memref<16x16xf32, #tpu.memory_space<vmem>>, vector<16x16xf32>
      %c0_63 = arith.constant 0 : index
      %c0_64 = arith.constant 0 : index
      %244 = vector.load %arg7[%c0_63, %c0_64] : memref<16x64xf32, #tpu.memory_space<vmem>>, vector<16x64xf32>
      %cst_65 = arith.constant dense<0.000000e+00> : vector<16x64xf32>
      %245 = tpu.matmul %243, %244, %cst_65 {dimension_numbers = #tpu.dot_dimension_numbers<[1], [0], [0], [1], [0, 0, 1, 1], [], []>} : vector<16x16xf32>, vector<16x64xf32>, vector<16x64xf32> -> vector<16x64xf32>
      %c0_66 = arith.constant 0 : index
      %c0_67 = arith.constant 0 : index
      %246 = vector.load %arg8[%c0_66, %c0_67] : memref<1x64xf32, #tpu.memory_space<vmem>>, vector<1x64xf32>
      %247 = vector.broadcast %246 : vector<1x64xf32> to vector<16x64xf32>
      %248 = arith.addf %245, %247 : vector<16x64xf32>
      %cst_68 = arith.constant 0.000000e+00 : f32
      %249 = vector.broadcast %cst_68 : f32 to vector<16x64xf32>
      %250 = arith.maximumf %248, %249 : vector<16x64xf32>
      %c0_69 = arith.constant 0 : index
      %c0_70 = arith.constant 0 : index
      %251 = vector.load %arg9[%c0_69, %c0_70] : memref<64x64xf32, #tpu.memory_space<vmem>>, vector<64x64xf32>
      %cst_71 = arith.constant dense<0.000000e+00> : vector<16x64xf32>
      %252 = tpu.matmul %237, %251, %cst_71 {dimension_numbers = #tpu.dot_dimension_numbers<[1], [0], [0], [1], [0, 0, 1, 1], [], []>} : vector<16x64xf32>, vector<64x64xf32>, vector<16x64xf32> -> vector<16x64xf32>
      %c0_72 = arith.constant 0 : index
      %c0_73 = arith.constant 0 : index
      %253 = vector.load %arg10[%c0_72, %c0_73] : memref<64x64xf32, #tpu.memory_space<vmem>>, vector<64x64xf32>
      %cst_74 = arith.constant dense<0.000000e+00> : vector<16x64xf32>
      %254 = tpu.matmul %250, %253, %cst_74 {dimension_numbers = #tpu.dot_dimension_numbers<[1], [0], [0], [1], [0, 0, 1, 1], [], []>} : vector<16x64xf32>, vector<64x64xf32>, vector<16x64xf32> -> vector<16x64xf32>
      %255 = arith.addf %252, %254 : vector<16x64xf32>
      %c0_75 = arith.constant 0 : index
      %c0_76 = arith.constant 0 : index
      %256 = vector.load %arg11[%c0_75, %c0_76] : memref<1x64xf32, #tpu.memory_space<vmem>>, vector<1x64xf32>
      %257 = vector.broadcast %256 : vector<1x64xf32> to vector<16x64xf32>
      %258 = arith.addf %255, %257 : vector<16x64xf32>
      %cst_77 = arith.constant 0.000000e+00 : f32
      %259 = vector.broadcast %cst_77 : f32 to vector<16x64xf32>
      %260 = arith.maximumf %258, %259 : vector<16x64xf32>
      %c0_78 = arith.constant 0 : index
      %c0_79 = arith.constant 0 : index
      %261 = vector.load %arg12[%c0_78, %c0_79] : memref<1x64xf32, #tpu.memory_space<vmem>>, vector<1x64xf32>
      %262 = vector.broadcast %261 : vector<1x64xf32> to vector<16x64xf32>
      %263 = arith.mulf %260, %262 : vector<16x64xf32>
      %cst_80 = arith.constant dense<0.000000e+00> : vector<16xf32>
      %264 = vector.multi_reduction <add>, %263, %cst_80 [1] : vector<16x64xf32> to vector<16xf32>
      %265 = vector.shape_cast %264 : vector<16xf32> to vector<16x1xf32>
      %c0_81 = arith.constant 0 : index
      %c0_82 = arith.constant 0 : index
      %266 = vector.load %arg13[%c0_81, %c0_82] : memref<1x1xf32, #tpu.memory_space<vmem>>, vector<1x1xf32>
      %267 = vector.broadcast %266 : vector<1x1xf32> to vector<16x1xf32>
      %268 = arith.addf %265, %267 : vector<16x1xf32>
      %c0_83 = arith.constant 0 : index
      %c0_84 = arith.constant 0 : index
      %269 = vector.load %arg14[%c0_83, %c0_84] : memref<16x1xf32, #tpu.memory_space<vmem>>, vector<16x1xf32>
      tpu.vector_store %arg14[%c0_83, %c0_84], %268 {strides = array<i32>} : memref<16x1xf32, #tpu.memory_space<vmem>>, vector<16x1xf32>,
    } else {
    }
    return
  }
  func.func @transform_0(%arg0: i32, %arg1: i32) -> (i32, i32, i32) {
    %c0_i32 = arith.constant 0 : i32
    %c0_i32_0 = arith.constant 0 : i32
    return %arg1, %arg0, %c0_i32 : i32, i32, i32
  }
  func.func @transform_1(%arg0: i32, %arg1: i32) -> (i32, i32) {
    %c0_i32 = arith.constant 0 : i32
    %c0_i32_0 = arith.constant 0 : i32
    %c0_i32_1 = arith.constant 0 : i32
    return %c0_i32, %c0_i32_0 : i32, i32
  }
  func.func @transform_2(%arg0: i32, %arg1: i32) -> (i32, i32) {
    %c0_i32 = arith.constant 0 : i32
    %c0_i32_0 = arith.constant 0 : i32
    %c0_i32_1 = arith.constant 0 : i32
    return %c0_i32, %c0_i32_0 : i32, i32
  }
  func.func @transform_3(%arg0: i32, %arg1: i32) -> (i32, i32) {
    %c0_i32 = arith.constant 0 : i32
    %c0_i32_0 = arith.constant 0 : i32
    %c0_i32_1 = arith.constant 0 : i32
    return %c0_i32, %c0_i32_0 : i32, i32
  }
  func.func @transform_4(%arg0: i32, %arg1: i32) -> (i32, i32) {
    %c0_i32 = arith.constant 0 : i32
    %c0_i32_0 = arith.constant 0 : i32
    return %arg0, %c0_i32 : i32, i32
  }
  func.func @transform_5(%arg0: i32, %arg1: i32) -> (i32, i32) {
    %c0_i32 = arith.constant 0 : i32
    %c0_i32_0 = arith.constant 0 : i32
    %c0_i32_1 = arith.constant 0 : i32
    return %c0_i32, %c0_i32_0 : i32, i32
  }
  func.func @transform_6(%arg0: i32, %arg1: i32) -> (i32, i32) {
    %c0_i32 = arith.constant 0 : i32
    %c0_i32_0 = arith.constant 0 : i32
    %c0_i32_1 = arith.constant 0 : i32
    return %c0_i32, %c0_i32_0 : i32, i32
  }
  func.func @transform_7(%arg0: i32, %arg1: i32) -> (i32, i32) {
    %c0_i32 = arith.constant 0 : i32
    %c0_i32_0 = arith.constant 0 : i32
    %c0_i32_1 = arith.constant 0 : i32
    return %c0_i32, %c0_i32_0 : i32, i32
  }
  func.func @transform_8(%arg0: i32, %arg1: i32) -> (i32, i32) {
    %c0_i32 = arith.constant 0 : i32
    %c0_i32_0 = arith.constant 0 : i32
    %c0_i32_1 = arith.constant 0 : i32
    return %c0_i32, %c0_i32_0 : i32, i32
  }
  func.func @transform_9(%arg0: i32, %arg1: i32) -> (i32, i32) {
    %c0_i32 = arith.constant 0 : i32
    %c0_i32_0 = arith.constant 0 : i32
    %c0_i32_1 = arith.constant 0 : i32
    return %c0_i32, %c0_i32_0 : i32, i32
  }
  func.func @transform_10(%arg0: i32, %arg1: i32) -> (i32, i32) {
    %c0_i32 = arith.constant 0 : i32
    %c0_i32_0 = arith.constant 0 : i32
    %c0_i32_1 = arith.constant 0 : i32
    return %c0_i32, %c0_i32_0 : i32, i32
  }
  func.func @transform_11(%arg0: i32, %arg1: i32) -> (i32, i32) {
    %c0_i32 = arith.constant 0 : i32
    %c0_i32_0 = arith.constant 0 : i32
    %c0_i32_1 = arith.constant 0 : i32
    return %c0_i32, %c0_i32_0 : i32, i32
  }
  func.func @transform_12(%arg0: i32, %arg1: i32) -> (i32, i32) {
    %c0_i32 = arith.constant 0 : i32
    %c0_i32_0 = arith.constant 0 : i32
    return %arg0, %c0_i32 : i32, i32
  }
}

</mosaic_0001>

<llo_original>
// kernel: tpu_custom_call.1
$region0: #{tpu_custom_call.1}
  #allocation0 [shape = 'u32[]', space=smem, size = 0x4, offset = 0x4, fixed_abs, tag = 'smem constant byte address 0x4 - core index']
  #allocation1 [shape = 'u32[144,128]{1,0:T(1,128)}', space=vmem, size = 0x12000, scoped, tag = 'internal scratch']
  #allocation2 [shape = 'f32[128,256]{1,0:T(8,128)}', space=vmem, size = 0x20000, scoped, tag = 'scratch operand']
  #allocation3 [shape = 'f32[16,64]{1,0:T(8,128)}', space=vmem, size = 0x2000, scoped, tag = 'scratch operand']
  #allocation4 [shape = 'f32[16,64]{1,0:T(8,128)}', space=vmem, size = 0x2000, scoped, tag = 'scratch operand']
  #allocation5 [shape = 'f32[1,1]{1,0:T(1,128)S(1)}', space=vmem, size = 0x200, scoped, tag = 'scoped memory for tpu_custom_call.1']
  %s0 = inlined_call_operand.hbm [shape: bf16[8,16,64], index: 0, kind: input, shape index: {}]
  %s1 = inlined_call_operand.hbm [shape: bf16[64,256], index: 1, kind: input, shape index: {}]
  %s2 = inlined_call_operand.hbm [shape: bf16[64,256], index: 2, kind: input, shape index: {}]
  %s3 = inlined_call_operand.vmem [shape: f32[1,256], index: 3, kind: input, shape index: {}]
  %s4 = inlined_call_operand.vmem [shape: f32[16,16], index: 4, kind: input, shape index: {}]
  %s5 = inlined_call_operand.hbm [shape: f32[16,64], index: 5, kind: input, shape index: {}]
  %s6 = inlined_call_operand.vmem [shape: f32[1,64], index: 6, kind: input, shape index: {}]
  %s7 = inlined_call_operand.hbm [shape: f32[64,64], index: 7, kind: input, shape index: {}]
  %s8 = inlined_call_operand.hbm [shape: f32[64,64], index: 8, kind: input, shape index: {}]
  %s9 = inlined_call_operand.vmem [shape: f32[1,64], index: 9, kind: input, shape index: {}]
  %s10 = inlined_call_operand.vmem [shape: f32[1,64], index: 10, kind: input, shape index: {}]
  %s11 = inlined_call_operand.<no memory space> [shape: f32[1,1], index: 11, kind: input, shape index: {}]
  %s12 = inlined_call_operand.vmem [shape: f32[16,1], index: 12, kind: output, shape index: {}]
  %s13 = sld [smem:[#allocation0]]
  $region90: #{tpu_custom_call.1} parent=0
    _
  %s15 = ssub.s32 1, %s13
  %s16 = scalar_select 0, %s15, %s13
  %v17 = vstv %s11
  %18 = vst [vmem:[#allocation5] sm:$0x1] %v17
  $region1: #{tpu_custom_call.1} parent=0
    #allocation6 [shape = 'u8[32768]{0}', space=vmem, size = 0x8000, scoped, tag = 'input window, operand 0, single buffered']
    #allocation7 [shape = 's32[1]{0}', space=sflag, size = 0x4, scoped, tag = 'scoped memory for tpu_custom_call.1']
    #allocation8 [shape = 'u8[32768]{0}', space=vmem, size = 0x8000, scoped, tag = 'input window, operand 1, single buffered']
    #allocation9 [shape = 's32[1]{0}', space=sflag, size = 0x4, scoped, tag = 'scoped memory for tpu_custom_call.1']
    #allocation10 [shape = 'u8[32768]{0}', space=vmem, size = 0x8000, scoped, tag = 'input window, operand 2, single buffered']
    #allocation11 [shape = 'u8[8192]{0}', space=vmem, size = 0x2000, scoped, tag = 'input window, operand 5, single buffered']
    #allocation12 [shape = 's32[1]{0}', space=sflag, size = 0x4, scoped, tag = 'scoped memory for tpu_custom_call.1']
    #allocation13 [shape = 'u8[32768]{0}', space=vmem, size = 0x8000, scoped, tag = 'input window, operand 7, single buffered']
    #allocation14 [shape = 'u8[32768]{0}', space=vmem, size = 0x8000, scoped, tag = 'input window, operand 8, single buffered']
    #allocation15 [shape = 's32[1]{0}', space=sflag, size = 0x4, scoped, tag = 'scoped memory for tpu_custom_call.1']
    %19 = vsyncpa [#allocation7], 0
    %20 = vsyncpa [#allocation9], 0
    %21 = vsyncpa [#allocation12], 0
    %22 = vsyncpa [#allocation15], 0
    // Predicated region
    $region2: #{tpu_custom_call.1} parent=1 // pred_check
      _
    $region3: #{tpu_custom_call.1} parent=1 // pred_check_branch
      %24 = sbr.rel (0) target = $region5
    $region4: #{tpu_custom_call.1} parent=1 // pred_region
      %s26 = ssub.s32 1024, 1024
      %27 = vsyncadd [#allocation7], %s26
      %s28 = sshll.u32 [#allocation6], 4
      %s29 = int_to_ptr.vmem [resolvable:$true] %s28
      %34 = dma.hbm_to_vmem [thread:$0]  %s0, 1024, %s29, [#allocation7], 64, 64, 4
    $region5: #{tpu_custom_call.1} parent=1 // pred_fallthru
      _
    // Predicated region
    $region6: #{tpu_custom_call.1} parent=1 // pred_check
      _
    $region7: #{tpu_custom_call.1} parent=1 // pred_check_branch
      %36 = sbr.rel (0) target = $region9
    $region8: #{tpu_custom_call.1} parent=1 // pred_region
      %s38 = ssub.s32 1024, 1024
      %39 = vsyncadd [#allocation9], %s38
      %s40 = sshll.u32 [#allocation8], 4
      %s41 = int_to_ptr.vmem [resolvable:$true] %s40
      %46 = dma.hbm_to_vmem [thread:$0]  %s1, 1024, %s41, [#allocation9], 128, 128, 8
    $region9: #{tpu_custom_call.1} parent=1 // pred_fallthru
      _
    // Predicated region
    $region10: #{tpu_custom_call.1} parent=1 // pred_check
      _
    $region11: #{tpu_custom_call.1} parent=1 // pred_check_branch
      %48 = sbr.rel (0) target = $region13
    $region12: #{tpu_custom_call.1} parent=1 // pred_region
      %s50 = ssub.s32 1024, 1024
      %51 = vsyncadd [#allocation9], %s50
      %s52 = sshll.u32 [#allocation10], 4
      %s53 = int_to_ptr.vmem [resolvable:$true] %s52
      %58 = dma.hbm_to_vmem [thread:$0]  %s2, 1024, %s53, [#allocation9], 128, 128, 8
    $region13: #{tpu_custom_call.1} parent=1 // pred_fallthru
      _
    // Predicated region
    $region14: #{tpu_custom_call.1} parent=1 // pred_check
      _
    $region15: #{tpu_custom_call.1} parent=1 // pred_check_branch
      %60 = sbr.rel (0) target = $region17
    $region16: #{tpu_custom_call.1} parent=1 // pred_region
      _
    $region17: #{tpu_custom_call.1} parent=1 // pred_fallthru
      _
    // Predicated region
    $region18: #{tpu_custom_call.1} parent=1 // pred_check
      _
    $region19: #{tpu_custom_call.1} parent=1 // pred_check_branch
      %62 = sbr.rel (0) target = $region21
    $region20: #{tpu_custom_call.1} parent=1 // pred_region
      _
    $region21: #{tpu_custom_call.1} parent=1 // pred_fallthru
      _
    // Predicated region
    $region22: #{tpu_custom_call.1} parent=1 // pred_check
      _
    $region23: #{tpu_custom_call.1} parent=1 // pred_check_branch
      %64 = sbr.rel (0) target = $region25
    $region24: #{tpu_custom_call.1} parent=1 // pred_region
      %s66 = ssub.s32 256, 256
      %67 = vsyncadd [#allocation12], %s66
      %s68 = sshll.u32 [#allocation11], 4
      %s69 = int_to_ptr.vmem [resolvable:$true] %s68
      %74 = dma.hbm_to_vmem [thread:$0]  %s5, 256, %s69, [#allocation12], 128, 128, 8
    $region25: #{tpu_custom_call.1} parent=1 // pred_fallthru
      _
    // Predicated region
    $region26: #{tpu_custom_call.1} parent=1 // pred_check
      _
    $region27: #{tpu_custom_call.1} parent=1 // pred_check_branch
      %76 = sbr.rel (0) target = $region29
    $region28: #{tpu_custom_call.1} parent=1 // pred_region
      _
    $region29: #{tpu_custom_call.1} parent=1 // pred_fallthru
      _
    // Predicated region
    $region30: #{tpu_custom_call.1} parent=1 // pred_check
      _
    $region31: #{tpu_custom_call.1} parent=1 // pred_check_branch
      %78 = sbr.rel (0) target = $region33
    $region32: #{tpu_custom_call.1} parent=1 // pred_region
      %s80 = ssub.s32 1024, 1024
      %81 = vsyncadd [#allocation12], %s80
      %s82 = sshll.u32 [#allocation13], 4
      %s83 = int_to_ptr.vmem [resolvable:$true] %s82
      %88 = dma.hbm_to_vmem [thread:$0]  %s7, 1024, %s83, [#allocation12], 128, 128, 8
    $region33: #{tpu_custom_call.1} parent=1 // pred_fallthru
      _
    // Predicated region
    $region34: #{tpu_custom_call.1} parent=1 // pred_check
      _
    $region35: #{tpu_custom_call.1} parent=1 // pred_check_branch
      %90 = sbr.rel (0) target = $region37
    $region36: #{tpu_custom_call.1} parent=1 // pred_region
      %s92 = ssub.s32 1024, 1024
      %93 = vsyncadd [#allocation15], %s92
      %s94 = sshll.u32 [#allocation14], 4
      %s95 = int_to_ptr.vmem [resolvable:$true] %s94
      %100 = dma.hbm_to_vmem [thread:$0]  %s8, 1024, %s95, [#allocation15], 128, 128, 8
    $region37: #{tpu_custom_call.1} parent=1 // pred_fallthru
      _
    // Predicated region
    $region38: #{tpu_custom_call.1} parent=1 // pred_check
      _
    $region39: #{tpu_custom_call.1} parent=1 // pred_check_branch
      %102 = sbr.rel (0) target = $region41
    $region40: #{tpu_custom_call.1} parent=1 // pred_region
      _
    $region41: #{tpu_custom_call.1} parent=1 // pred_fallthru
      _
    // Predicated region
    $region42: #{tpu_custom_call.1} parent=1 // pred_check
      _
    $region43: #{tpu_custom_call.1} parent=1 // pred_check_branch
      %104 = sbr.rel (0) target = $region45
    $region44: #{tpu_custom_call.1} parent=1 // pred_region
      _
    $region45: #{tpu_custom_call.1} parent=1 // pred_fallthru
      _
    // Predicated region
    $region46: #{tpu_custom_call.1} parent=1 // pred_check
      _
    $region47: #{tpu_custom_call.1} parent=1 // pred_check_branch
      %106 = sbr.rel (0) target = $region49
    $region48: #{tpu_custom_call.1} parent=1 // pred_region
      _
    $region49: #{tpu_custom_call.1} parent=1 // pred_fallthru
      _
    // Predicated region
    $region50: #{tpu_custom_call.1} parent=1 // pred_check
      _
    $region51: #{tpu_custom_call.1} parent=1 // pred_check_branch
      %108 = sbr.rel (0) target = $region53
    $region52: #{tpu_custom_call.1} parent=1 // pred_region
      %109 = dma.done [#allocation7], 1024
    $region53: #{tpu_custom_call.1} parent=1 // pred_fallthru
      _
    // Predicated region
    $region54: #{tpu_custom_call.1} parent=1 // pred_check
      _
    $region55: #{tpu_custom_call.1} parent=1 // pred_check_branch
      %111 = sbr.rel (0) target = $region57
    $region56: #{tpu_custom_call.1} parent=1 // pred_region
      %112 = dma.done [#allocation9], 1024
    $region57: #{tpu_custom_call.1} parent=1 // pred_fallthru
      _
    // Predicated region
    $region58: #{tpu_custom_call.1} parent=1 // pred_check
      _
    $region59: #{tpu_custom_call.1} parent=1 // pred_check_branch
      %114 = sbr.rel (0) target = $region61
    $region60: #{tpu_custom_call.1} parent=1 // pred_region
      %115 = dma.done [#allocation9], 1024
    $region61: #{tpu_custom_call.1} parent=1 // pred_fallthru
      _
    // Predicated region
    $region62: #{tpu_custom_call.1} parent=1 // pred_check
      _
    $region63: #{tpu_custom_call.1} parent=1 // pred_check_branch
      %117 = sbr.rel (0) target = $region65
    $region64: #{tpu_custom_call.1} parent=1 // pred_region
      %118 = dma.done [#allocation12], 256
    $region65: #{tpu_custom_call.1} parent=1 // pred_fallthru
      _
    // Predicated region
    $region66: #{tpu_custom_call.1} parent=1 // pred_check
      _
    $region67: #{tpu_custom_call.1} parent=1 // pred_check_branch
      %120 = sbr.rel (0) target = $region69
    $region68: #{tpu_custom_call.1} parent=1 // pred_region
      %121 = dma.done [#allocation12], 1024
    $region69: #{tpu_custom_call.1} parent=1 // pred_fallthru
      _
    // Predicated region
    $region70: #{tpu_custom_call.1} parent=1 // pred_check
      _
    $region71: #{tpu_custom_call.1} parent=1 // pred_check_branch
      %123 = sbr.rel (0) target = $region73
    $region72: #{tpu_custom_call.1} parent=1 // pred_region
      %124 = dma.done [#allocation15], 1024
    $region73: #{tpu_custom_call.1} parent=1 // pred_fallthru
      _
    %p126 = scmp.eq.s32.totalorder 0, 0
    // Predicated region
    $region74: #{tpu_custom_call.1} parent=1 // pred_check
      %p127 = pneg %p126
    $region75: #{tpu_custom_call.1} parent=1 // pred_check_branch
      %129 = sbr.rel (%p127) target = $region77
    $region76: #{tpu_custom_call.1} parent=1 // pred_region
      %vm130 = vcmask 523264
      %131 = vst.msk [vmem:[#allocation3] sm:$0xff] %vm130, 0.0
      %132 = vst.msk [vmem:[#allocation3 + $0x8] sm:$0xff] %vm130, 0.0
      %133 = vst.msk [vmem:[#allocation4] sm:$0xff] %vm130, 0.0
      %134 = vst.msk [vmem:[#allocation4 + $0x8] sm:$0xff] %vm130, 0.0
    $region77: #{tpu_custom_call.1} parent=1 // pred_fallthru
      _
    %v135 = vld [vmem:[#allocation6] sm:$0xf]
    %v136 = vld [vmem:[#allocation6 + $0x4] sm:$0xf]
    %v137 = vld [vmem:[#allocation6 + $0x8] sm:$0xf]
    %v138 = vld [vmem:[#allocation6 + $0xc] sm:$0xf]
    %v139 = vld [vmem:[#allocation6 + $0x10] sm:$0xf]
    %v140 = vld [vmem:[#allocation6 + $0x14] sm:$0xf]
    %v141 = vld [vmem:[#allocation6 + $0x18] sm:$0xf]
    %v142 = vld [vmem:[#allocation6 + $0x1c] sm:$0xf]
    %v143 = vld [vmem:[#allocation6 + $0x20] sm:$0xf]
    %v144 = vld [vmem:[#allocation6 + $0x24] sm:$0xf]
    %v145 = vld [vmem:[#allocation6 + $0x28] sm:$0xf]
    %v146 = vld [vmem:[#allocation6 + $0x2c] sm:$0xf]
    %v147 = vld [vmem:[#allocation6 + $0x30] sm:$0xf]
    %v148 = vld [vmem:[#allocation6 + $0x34] sm:$0xf]
    %v149 = vld [vmem:[#allocation6 + $0x38] sm:$0xf]
    %v150 = vld [vmem:[#allocation6 + $0x3c] sm:$0xf]
    %v151 = vld [vmem:[#allocation8] sm:$0xff]
    %v152 = vld [vmem:[#allocation8 + $0x8] sm:$0xff]
    %v153 = vld [vmem:[#allocation8 + $0x10] sm:$0xff]
    %v154 = vld [vmem:[#allocation8 + $0x18] sm:$0xff]
    %v155 = vld [vmem:[#allocation8 + $0x20] sm:$0xff]
    %v156 = vld [vmem:[#allocation8 + $0x28] sm:$0xff]
    %v157 = vld [vmem:[#allocation8 + $0x30] sm:$0xff]
    %v158 = vld [vmem:[#allocation8 + $0x38] sm:$0xff]
    %v159 = vld [vmem:[%s3] sm:$0x3]
    %v161 = vlaneseq
    %v162 = vshrl.u32 %v161, 7
    %v163 = vsub.s32 0, %v162
    %v164 = vrot.slane %v159, %v163
    %v165 = vlaneseq
    %v166 = vshrl.u32 %v165, 7
    %v167 = vsub.s32 1, %v166
    %v168 = vrot.slane %v159, %v167
    %v187 = vunpack.c.l.b16 %v135
    %v188 = vunpack.c.l.b16 %v136
    %v189 = vunpack.c.l.b16 %v137
    %v190 = vunpack.c.l.b16 %v138
    %v191 = vunpack.c.l.b16 %v139
    %v192 = vunpack.c.l.b16 %v140
    %v193 = vunpack.c.l.b16 %v141
    %v194 = vunpack.c.l.b16 %v142
    %v195 = vunpack.c.l.b16 %v143
    %v196 = vunpack.c.l.b16 %v144
    %v197 = vunpack.c.l.b16 %v145
    %v198 = vunpack.c.l.b16 %v146
    %v199 = vunpack.c.l.b16 %v147
    %v200 = vunpack.c.l.b16 %v148
    %v201 = vunpack.c.l.b16 %v149
    %v202 = vunpack.c.l.b16 %v150
    %v203 = vpack.c.b16 %v188, %v187
    %v204 = vpack.c.b16 %v190, %v189
    %v205 = vpack.c.b16 %v192, %v191
    %v206 = vpack.c.b16 %v194, %v193
    %v207 = vpack.c.b16 %v196, %v195
    %v208 = vpack.c.b16 %v198, %v197
    %v209 = vpack.c.b16 %v200, %v199
    %v210 = vpack.c.b16 %v202, %v201
    %v219 = vunpack.c.l.b16 %v151
    %v220 = vunpack.c.h.b16 %v151
    %v221 = vunpack.c.l.b16 %v152
    %v222 = vunpack.c.h.b16 %v152
    %v223 = vunpack.c.l.b16 %v153
    %v224 = vunpack.c.h.b16 %v153
    %v225 = vunpack.c.l.b16 %v154
    %v226 = vunpack.c.h.b16 %v154
    %v227 = vunpack.c.l.b16 %v155
    %v228 = vunpack.c.h.b16 %v155
    %v229 = vunpack.c.l.b16 %v156
    %v230 = vunpack.c.h.b16 %v156
    %v231 = vunpack.c.l.b16 %v157
    %v232 = vunpack.c.h.b16 %v157
    %v233 = vunpack.c.l.b16 %v158
    %v234 = vunpack.c.h.b16 %v158
    %v235 = vpack.c.b16 %v221, %v219
    %v236 = vpack.c.b16 %v222, %v220
    %v237 = vpack.c.b16 %v225, %v223
    %v238 = vpack.c.b16 %v226, %v224
    %v239 = vpack.c.b16 %v229, %v227
    %v240 = vpack.c.b16 %v230, %v228
    %v241 = vpack.c.b16 %v233, %v231
    %v242 = vpack.c.b16 %v234, %v232
    %vm251 = vcmask 523264
    %v253 = vsel %vm251, %v203, 0
    %v256 = vsel %vm251, %v204, 0
    %v259 = vsel %vm251, %v205, 0
    %v262 = vsel %vm251, %v206, 0
    %v265 = vsel %vm251, %v207, 0
    %v268 = vsel %vm251, %v208, 0
    %v271 = vsel %vm251, %v209, 0
    %v274 = vsel %vm251, %v210, 0
    %276 = vmatprep.subr.bf16.mxu0 %v236
    %277 = vmatpush1.bf16.msra.mxu0 %v235
    %278 = vmatprep.subr.bf16.mxu0 %v238
    %279 = vmatpush1.bf16.msra.mxu0 %v237
    %280 = vmatprep.subr.bf16.mxu0 %v240
    %281 = vmatpush1.bf16.msra.mxu0 %v239
    %282 = vmatprep.subr.bf16.mxu0 %v242
    %283 = vmatpush1.bf16.msra.mxu0 %v241
    %284 = vmatprep.subr.bf16.mxu0 0
    %285 = vmatpush1.bf16.msra.mxu0 0
    %286 = vmatprep.subr.bf16.mxu0 0
    %287 = vmatpush1.bf16.msra.mxu0 0
    %288 = vmatprep.subr.bf16.mxu0 0
    %289 = vmatpush1.bf16.msra.mxu0 0
    %290 = vmatprep.subr.bf16.mxu0 0
    %291 = vmatpush1.bf16.msra.mxu0 0
    %292 = vmatprep.subr.bf16.mxu0 0
    %293 = vmatpush1.bf16.msra.mxu0 0
    %294 = vmatprep.subr.bf16.mxu0 0
    %295 = vmatpush1.bf16.msra.mxu0 0
    %296 = vmatprep.subr.bf16.mxu0 0
    %297 = vmatpush1.bf16.msra.mxu0 0
    %298 = vmatprep.subr.bf16.mxu0 0
    %299 = vmatpush1.bf16.msra.mxu0 0
    %300 = vmatprep.subr.bf16.mxu0 0
    %301 = vmatpush1.bf16.msra.mxu0 0
    %302 = vmatprep.subr.bf16.mxu0 0
    %303 = vmatpush1.bf16.msra.mxu0 0
    %304 = vmatprep.subr.bf16.mxu0 0
    %305 = vmatpush1.bf16.msra.mxu0 0
    %306 = vmatprep.subr.bf16.mxu0 0
    %307 = vmatpush1.bf16.msra.mxu0 0
    %308 = vmatprep.mubr.bf16.mxu0 0
    %309 = vmatmul.mubr.bf16.gmra.mrb[0].mxu0 %v253
    %v310 = vpop.f32.mrb[0].mxu0
    %v311 = vadd.f32 %v164, %v310
    %v312 = vpop.f32.mrb[0].mxu0
    %v313 = vadd.f32 %v168, %v312
    %v314 = vpop.f32.mrb[0].mxu0
    %v315 = vadd.f32 %v164, %v314
    %v316 = vpop.f32.mrb[0].mxu0
    %v317 = vadd.f32 %v168, %v316
    %318 = vmatprep.mubr.bf16.mxu0 0
    %319 = vmatmul.mubr.bf16.gmra.mrb[0].mxu0 %v256
    %v320 = vpop.f32.mrb[0].mxu0
    %v321 = vadd.f32 %v164, %v320
    %v322 = vpop.f32.mrb[0].mxu0
    %v323 = vadd.f32 %v168, %v322
    %v324 = vpop.f32.mrb[0].mxu0
    %v325 = vadd.f32 %v164, %v324
    %v326 = vpop.f32.mrb[0].mxu0
    %v327 = vadd.f32 %v168, %v326
    %328 = vmatprep.mubr.bf16.mxu0 0
    %329 = vmatmul.mubr.bf16.gmra.mrb[0].mxu0 %v259
    %v330 = vpop.f32.mrb[0].mxu0
    %v331 = vadd.f32 %v164, %v330
    %v332 = vpop.f32.mrb[0].mxu0
    %v333 = vadd.f32 %v168, %v332
    %v334 = vpop.f32.mrb[0].mxu0
    %v335 = vadd.f32 %v164, %v334
    %v336 = vpop.f32.mrb[0].mxu0
    %v337 = vadd.f32 %v168, %v336
    %338 = vmatprep.mubr.bf16.mxu0 0
    %339 = vmatmul.mubr.bf16.gmra.mrb[0].mxu0 %v262
    %v340 = vpop.f32.mrb[0].mxu0
    %v341 = vadd.f32 %v164, %v340
    %v342 = vpop.f32.mrb[0].mxu0
    %v343 = vadd.f32 %v168, %v342
    %v344 = vpop.f32.mrb[0].mxu0
    %v345 = vadd.f32 %v164, %v344
    %v346 = vpop.f32.mrb[0].mxu0
    %v347 = vadd.f32 %v168, %v346
    %348 = vmatprep.mubr.bf16.mxu0 0
    %349 = vmatmul.mubr.bf16.gmra.mrb[0].mxu0 %v265
    %v350 = vpop.f32.mrb[0].mxu0
    %v351 = vadd.f32 %v164, %v350
    %v352 = vpop.f32.mrb[0].mxu0
    %v353 = vadd.f32 %v168, %v352
    %v354 = vpop.f32.mrb[0].mxu0
    %v355 = vadd.f32 %v164, %v354
    %v356 = vpop.f32.mrb[0].mxu0
    %v357 = vadd.f32 %v168, %v356
    %358 = vmatprep.mubr.bf16.mxu0 0
    %359 = vmatmul.mubr.bf16.gmra.mrb[0].mxu0 %v268
    %v360 = vpop.f32.mrb[0].mxu0
    %v361 = vadd.f32 %v164, %v360
    %v362 = vpop.f32.mrb[0].mxu0
    %v363 = vadd.f32 %v168, %v362
    %v364 = vpop.f32.mrb[0].mxu0
    %v365 = vadd.f32 %v164, %v364
    %v366 = vpop.f32.mrb[0].mxu0
    %v367 = vadd.f32 %v168, %v366
    %368 = vmatprep.mubr.bf16.mxu0 0
    %369 = vmatmul.mubr.bf16.gmra.mrb[0].mxu0 %v271
    %v370 = vpop.f32.mrb[0].mxu0
    %v371 = vadd.f32 %v164, %v370
    %v372 = vpop.f32.mrb[0].mxu0
    %v373 = vadd.f32 %v168, %v372
    %v374 = vpop.f32.mrb[0].mxu0
    %v375 = vadd.f32 %v164, %v374
    %v376 = vpop.f32.mrb[0].mxu0
    %v377 = vadd.f32 %v168, %v376
    %378 = vmatprep.mubr.bf16.mxu0 0
    %379 = vmatmul.mubr.bf16.gmra.mrb[0].mxu0 %v274
    %v380 = vpop.f32.mrb[0].mxu0
    %v381 = vadd.f32 %v164, %v380
    %v382 = vpop.f32.mrb[0].mxu0
    %v383 = vadd.f32 %v168, %v382
    %v384 = vpop.f32.mrb[0].mxu0
    %v385 = vadd.f32 %v164, %v384
    %v386 = vpop.f32.mrb[0].mxu0
    %v387 = vadd.f32 %v168, %v386
    %388 = vdwg.mxu0
    %389 = vst [vmem:[#allocation2] sm:$0xff] %v311
    %390 = vst [vmem:[#allocation2 + $0x8] sm:$0xff] %v313
    %391 = vst [vmem:[#allocation2 + $0x10] sm:$0xff] %v315
    %392 = vst [vmem:[#allocation2 + $0x18] sm:$0xff] %v317
    %393 = vst [vmem:[#allocation2 + $0x20] sm:$0xff] %v321
    %394 = vst [vmem:[#allocation2 + $0x28] sm:$0xff] %v323
    %395 = vst [vmem:[#allocation2 + $0x30] sm:$0xff] %v325
    %396 = vst [vmem:[#allocation2 + $0x38] sm:$0xff] %v327
    %397 = vst [vmem:[#allocation2 + $0x40] sm:$0xff] %v331
    %398 = vst [vmem:[#allocation2 + $0x48] sm:$0xff] %v333
    %399 = vst [vmem:[#allocation2 + $0x50] sm:$0xff] %v335
    %400 = vst [vmem:[#allocation2 + $0x58] sm:$0xff] %v337
    %401 = vst [vmem:[#allocation2 + $0x60] sm:$0xff] %v341
    %402 = vst [vmem:[#allocation2 + $0x68] sm:$0xff] %v343
    %403 = vst [vmem:[#allocation2 + $0x70] sm:$0xff] %v345
    %404 = vst [vmem:[#allocation2 + $0x78] sm:$0xff] %v347
    %405 = vst [vmem:[#allocation2 + $0x80] sm:$0xff] %v351
    %406 = vst [vmem:[#allocation2 + $0x88] sm:$0xff] %v353
    %407 = vst [vmem:[#allocation2 + $0x90] sm:$0xff] %v355
    %408 = vst [vmem:[#allocation2 + $0x98] sm:$0xff] %v357
    %409 = vst [vmem:[#allocation2 + $0xa0] sm:$0xff] %v361
    %410 = vst [vmem:[#allocation2 + $0xa8] sm:$0xff] %v363
    %411 = vst [vmem:[#allocation2 + $0xb0] sm:$0xff] %v365
    %412 = vst [vmem:[#allocation2 + $0xb8] sm:$0xff] %v367
    %413 = vst [vmem:[#allocation2 + $0xc0] sm:$0xff] %v371
    %414 = vst [vmem:[#allocation2 + $0xc8] sm:$0xff] %v373
    %415 = vst [vmem:[#allocation2 + $0xd0] sm:$0xff] %v375
    %416 = vst [vmem:[#allocation2 + $0xd8] sm:$0xff] %v377
    %417 = vst [vmem:[#allocation2 + $0xe0] sm:$0xff] %v381
    %418 = vst [vmem:[#allocation2 + $0xe8] sm:$0xff] %v383
    %419 = vst [vmem:[#allocation2 + $0xf0] sm:$0xff] %v385
    %420 = vst [vmem:[#allocation2 + $0xf8] sm:$0xff] %v387
    %v421 = vld [vmem:[#allocation10] sm:$0xff]
    %v422 = vld [vmem:[#allocation10 + $0x8] sm:$0xff]
    %v423 = vld [vmem:[#allocation10 + $0x10] sm:$0xff]
    %v424 = vld [vmem:[#allocation10 + $0x18] sm:$0xff]
    %v425 = vld [vmem:[#allocation10 + $0x20] sm:$0xff]
    %v426 = vld [vmem:[#allocation10 + $0x28] sm:$0xff]
    %v427 = vld [vmem:[#allocation10 + $0x30] sm:$0xff]
    %v428 = vld [vmem:[#allocation10 + $0x38] sm:$0xff]
    %v429 = vld [vmem:[#allocation3] sm:$0xff]
    %v430 = vld [vmem:[#allocation3 + $0x8] sm:$0xff]
    %v431 = vld [vmem:[#allocation4] sm:$0xff]
    %v432 = vld [vmem:[#allocation4 + $0x8] sm:$0xff]
    %s433 = smul.u32 0, 2
    %s434 = smul.addr %s433, 8
    %s435 = scalar_lea.vmem [#allocation2], %s434
    %v436 = vld [vmem:[%s435] sm:$0xff]
    %v437 = vld [vmem:[%s435 + $0x8] sm:$0xff]
    %v438 = vld [vmem:[%s435 + $0x10] sm:$0xff]
    %v439 = vld [vmem:[%s435 + $0x18] sm:$0xff]
    %v440 = vpack.c.bf16 %v430, %v429
    %v449 = vunpack.c.l.b16 %v421
    %v450 = vunpack.c.h.b16 %v421
    %v451 = vunpack.c.l.b16 %v422
    %v452 = vunpack.c.h.b16 %v422
    %v453 = vunpack.c.l.b16 %v423
    %v454 = vunpack.c.h.b16 %v423
    %v455 = vunpack.c.l.b16 %v424
    %v456 = vunpack.c.h.b16 %v424
    %v457 = vunpack.c.l.b16 %v425
    %v458 = vunpack.c.h.b16 %v425
    %v459 = vunpack.c.l.b16 %v426
    %v460 = vunpack.c.h.b16 %v426
    %v461 = vunpack.c.l.b16 %v427
    %v462 = vunpack.c.h.b16 %v427
    %v463 = vunpack.c.l.b16 %v428
    %v464 = vunpack.c.h.b16 %v428
    %v465 = vpack.c.b16 %v451, %v449
    %v466 = vpack.c.b16 %v452, %v450
    %v467 = vpack.c.b16 %v455, %v453
    %v468 = vpack.c.b16 %v456, %v454
    %v469 = vpack.c.b16 %v459, %v457
    %v470 = vpack.c.b16 %v460, %v458
    %v471 = vpack.c.b16 %v463, %v461
    %v472 = vpack.c.b16 %v464, %v462
    %v482 = vsel %vm251, %v440, 0
    %484 = vmatprep.subr.bf16.mxu0 %v466
    %485 = vmatpush1.bf16.msra.mxu0 %v465
    %486 = vmatprep.subr.bf16.mxu0 %v468
    %487 = vmatpush1.bf16.msra.mxu0 %v467
    %488 = vmatprep.subr.bf16.mxu0 %v470
    %489 = vmatpush1.bf16.msra.mxu0 %v469
    %490 = vmatprep.subr.bf16.mxu0 %v472
    %491 = vmatpush1.bf16.msra.mxu0 %v471
    %492 = vmatprep.subr.bf16.mxu0 0
    %493 = vmatpush1.bf16.msra.mxu0 0
    %494 = vmatprep.subr.bf16.mxu0 0
    %495 = vmatpush1.bf16.msra.mxu0 0
    %496 = vmatprep.subr.bf16.mxu0 0
    %497 = vmatpush1.bf16.msra.mxu0 0
    %498 = vmatprep.subr.bf16.mxu0 0
    %499 = vmatpush1.bf16.msra.mxu0 0
    %500 = vmatprep.subr.bf16.mxu0 0
    %501 = vmatpush1.bf16.msra.mxu0 0
    %502 = vmatprep.subr.bf16.mxu0 0
    %503 = vmatpush1.bf16.msra.mxu0 0
    %504 = vmatprep.subr.bf16.mxu0 0
    %505 = vmatpush1.bf16.msra.mxu0 0
    %506 = vmatprep.subr.bf16.mxu0 0
    %507 = vmatpush1.bf16.msra.mxu0 0
    %508 = vmatprep.subr.bf16.mxu0 0
    %509 = vmatpush1.bf16.msra.mxu0 0
    %510 = vmatprep.subr.bf16.mxu0 0
    %511 = vmatpush1.bf16.msra.mxu0 0
    %512 = vmatprep.subr.bf16.mxu0 0
    %513 = vmatpush1.bf16.msra.mxu0 0
    %514 = vmatprep.subr.bf16.mxu0 0
    %515 = vmatpush1.bf16.msra.mxu0 0
    %516 = vmatprep.mubr.bf16.mxu0 0
    %517 = vmatmul.mubr.bf16.gmra.mrb[0].mxu0 %v482
    %v518 = vpop.f32.mrb[0].mxu0
    %v519 = vadd.f32 0.0, %v518
    %v520 = vpop.f32.mrb[0].mxu0
    %v521 = vadd.f32 0.0, %v520
    %v522 = vpop.f32.mrb[0].mxu0
    %v523 = vadd.f32 0.0, %v522
    %v524 = vpop.f32.mrb[0].mxu0
    %v525 = vadd.f32 0.0, %v524
    %526 = vdwg.mxu0
    %v527 = vadd.f32 %v436, %v519
    %v528 = vadd.f32 %v437, %v521
    %v529 = vadd.f32 %v438, %v523
    %v530 = vadd.f32 %v439, %v525
    %v531 = vxor.u32 %v527, 2147483648
    %v532 = vxor.u32 %v529, 2147483648
    %v533 = vmul.f32 %v531, 1.442695
    %v534 = vpow.pop %v533
    %v535 = vmul.f32 %v532, 1.442695
    %v536 = vpow.pop %v535
    %v537 = vadd.f32 %v534, 1.0
    %v538 = vadd.f32 %v536, 1.0
    %v539 = vrcp.pop %v537
    %v540 = vmul.f32 1.0, %v539
    %v541 = vrcp.pop %v538
    %v542 = vmul.f32 1.0, %v541
    %v543 = vtanh.pop %v528
    %v544 = vtanh.pop %v530
    %v545 = vxor.u32 %v528, 2147483648
    %v546 = vxor.u32 %v530, 2147483648
    %v547 = vmul.f32 %v545, 1.442695
    %v548 = vpow.pop %v547
    %v549 = vmul.f32 %v546, 1.442695
    %v550 = vpow.pop %v549
    %v551 = vadd.f32 %v548, 1.0
    %v552 = vadd.f32 %v550, 1.0
    %v553 = vrcp.pop %v551
    %v554 = vmul.f32 1.0, %v553
    %v555 = vrcp.pop %v552
    %v556 = vmul.f32 1.0, %v555
    %559 = vrot.lane.b32.xlu0 %v431, 64
    %v560 = vpop.permute.xlu0 %559
    %561 = vrot.lane.b32.xlu0 %v432, 64
    %v562 = vpop.permute.xlu0 %561
    %v565 = vmul.f32 %v540, %v560
    %v566 = vmul.f32 %v542, %v562
    %v567 = vmul.f32 %v540, %v543
    %v568 = vmul.f32 %v542, %v544
    %571 = vrot.lane.b32.xlu0 %v567, 64
    %v572 = vpop.permute.xlu0 %571
    %573 = vrot.lane.b32.xlu0 %v568, 64
    %v574 = vpop.permute.xlu0 %573
    %v577 = vadd.f32 %v565, %v572
    %v578 = vadd.f32 %v566, %v574
    %v579 = vtanh.pop %v577
    %v580 = vtanh.pop %v578
    %v581 = vmul.f32 %v554, %v579
    %v582 = vmul.f32 %v556, %v580
    %s583 = smul.u32 2, 2
    %s584 = smul.addr %s583, 8
    %s585 = scalar_lea.vmem [#allocation2], %s584
    %v586 = vld [vmem:[%s585] sm:$0xff]
    %v587 = vld [vmem:[%s585 + $0x8] sm:$0xff]
    %v588 = vld [vmem:[%s585 + $0x10] sm:$0xff]
    %v589 = vld [vmem:[%s585 + $0x18] sm:$0xff]
    %v590 = vpack.c.bf16 %v582, %v581
    %592 = vrot.lane.b32.xlu0 %v590, 64
    %v593 = vpop.permute.xlu0 %592
    %v595 = vsel %vm251, %v593, 0
    %597 = vmatprep.subr.bf16.mxu0 %v466
    %598 = vmatpush1.bf16.msra.mxu0 %v465
    %599 = vmatprep.subr.bf16.mxu0 %v468
    %600 = vmatpush1.bf16.msra.mxu0 %v467
    %601 = vmatprep.subr.bf16.mxu0 %v470
    %602 = vmatpush1.bf16.msra.mxu0 %v469
    %603 = vmatprep.subr.bf16.mxu0 %v472
    %604 = vmatpush1.bf16.msra.mxu0 %v471
    %605 = vmatprep.subr.bf16.mxu0 0
    %606 = vmatpush1.bf16.msra.mxu0 0
    %607 = vmatprep.subr.bf16.mxu0 0
    %608 = vmatpush1.bf16.msra.mxu0 0
    %609 = vmatprep.subr.bf16.mxu0 0
    %610 = vmatpush1.bf16.msra.mxu0 0
    %611 = vmatprep.subr.bf16.mxu0 0
    %612 = vmatpush1.bf16.msra.mxu0 0
    %613 = vmatprep.subr.bf16.mxu0 0
    %614 = vmatpush1.bf16.msra.mxu0 0
    %615 = vmatprep.subr.bf16.mxu0 0
    %616 = vmatpush1.bf16.msra.mxu0 0
    %617 = vmatprep.subr.bf16.mxu0 0
    %618 = vmatpush1.bf16.msra.mxu0 0
    %619 = vmatprep.subr.bf16.mxu0 0
    %620 = vmatpush1.bf16.msra.mxu0 0
    %621 = vmatprep.subr.bf16.mxu0 0
    %622 = vmatpush1.bf16.msra.mxu0 0
    %623 = vmatprep.subr.bf16.mxu0 0
    %624 = vmatpush1.bf16.msra.mxu0 0
    %625 = vmatprep.subr.bf16.mxu0 0
    %626 = vmatpush1.bf16.msra.mxu0 0
    %627 = vmatprep.subr.bf16.mxu0 0
    %628 = vmatpush1.bf16.msra.mxu0 0
    %629 = vmatprep.mubr.bf16.mxu0 0
    %630 = vmatmul.mubr.bf16.gmra.mrb[0].mxu0 %v595
    %v631 = vpop.f32.mrb[0].mxu0
    %v632 = vadd.f32 0.0, %v631
    %v633 = vpop.f32.mrb[0].mxu0
    %v634 = vadd.f32 0.0, %v633
    %v635 = vpop.f32.mrb[0].mxu0
    %v636 = vadd.f32 0.0, %v635
    %v637 = vpop.f32.mrb[0].mxu0
    %v638 = vadd.f32 0.0, %v637
    %639 = vdwg.mxu0
    %v640 = vadd.f32 %v586, %v632
    %v641 = vadd.f32 %v587, %v634
    %v642 = vadd.f32 %v588, %v636
    %v643 = vadd.f32 %v589, %v638
    %v644 = vxor.u32 %v640, 2147483648
    %v645 = vxor.u32 %v642, 2147483648
    %v646 = vmul.f32 %v644, 1.442695
    %v647 = vpow.pop %v646
    %v648 = vmul.f32 %v645, 1.442695
    %v649 = vpow.pop %v648
    %v650 = vadd.f32 %v647, 1.0
    %v651 = vadd.f32 %v649, 1.0
    %v652 = vrcp.pop %v650
    %v653 = vmul.f32 1.0, %v652
    %v654 = vrcp.pop %v651
    %v655 = vmul.f32 1.0, %v654
    %v656 = vtanh.pop %v641
    %v657 = vtanh.pop %v643
    %v658 = vxor.u32 %v641, 2147483648
    %v659 = vxor.u32 %v643, 2147483648
    %v660 = vmul.f32 %v658, 1.442695
    %v661 = vpow.pop %v660
    %v662 = vmul.f32 %v659, 1.442695
    %v663 = vpow.pop %v662
    %v664 = vadd.f32 %v661, 1.0
    %v665 = vadd.f32 %v663, 1.0
    %v666 = vrcp.pop %v664
    %v667 = vmul.f32 1.0, %v666
    %v668 = vrcp.pop %v665
    %v669 = vmul.f32 1.0, %v668
    %v670 = vmul.f32 %v653, %v577
    %v671 = vmul.f32 %v655, %v578
    %v672 = vmul.f32 %v653, %v656
    %v673 = vmul.f32 %v655, %v657
    %676 = vrot.lane.b32.xlu0 %v672, 64
    %v677 = vpop.permute.xlu0 %676
    %678 = vrot.lane.b32.xlu0 %v673, 64
    %v679 = vpop.permute.xlu0 %678
    %v682 = vadd.f32 %v670, %v677
    %v683 = vadd.f32 %v671, %v679
    %v684 = vtanh.pop %v682
    %v685 = vtanh.pop %v683
    %v686 = vmul.f32 %v667, %v684
    %v687 = vmul.f32 %v669, %v685
    %s688 = smul.u32 4, 2
    %s689 = smul.addr %s688, 8
    %s690 = scalar_lea.vmem [#allocation2], %s689
    %v691 = vld [vmem:[%s690] sm:$0xff]
    %v692 = vld [vmem:[%s690 + $0x8] sm:$0xff]
    %v693 = vld [vmem:[%s690 + $0x10] sm:$0xff]
    %v694 = vld [vmem:[%s690 + $0x18] sm:$0xff]
    %v695 = vpack.c.bf16 %v687, %v686
    %697 = vrot.lane.b32.xlu0 %v695, 64
    %v698 = vpop.permute.xlu0 %697
    %v700 = vsel %vm251, %v698, 0
    %702 = vmatprep.subr.bf16.mxu0 %v466
    %703 = vmatpush1.bf16.msra.mxu0 %v465
    %704 = vmatprep.subr.bf16.mxu0 %v468
    %705 = vmatpush1.bf16.msra.mxu0 %v467
    %706 = vmatprep.subr.bf16.mxu0 %v470
    %707 = vmatpush1.bf16.msra.mxu0 %v469
    %708 = vmatprep.subr.bf16.mxu0 %v472
    %709 = vmatpush1.bf16.msra.mxu0 %v471
    %710 = vmatprep.subr.bf16.mxu0 0
    %711 = vmatpush1.bf16.msra.mxu0 0
    %712 = vmatprep.subr.bf16.mxu0 0
    %713 = vmatpush1.bf16.msra.mxu0 0
    %714 = vmatprep.subr.bf16.mxu0 0
    %715 = vmatpush1.bf16.msra.mxu0 0
    %716 = vmatprep.subr.bf16.mxu0 0
    %717 = vmatpush1.bf16.msra.mxu0 0
    %718 = vmatprep.subr.bf16.mxu0 0
    %719 = vmatpush1.bf16.msra.mxu0 0
    %720 = vmatprep.subr.bf16.mxu0 0
    %721 = vmatpush1.bf16.msra.mxu0 0
    %722 = vmatprep.subr.bf16.mxu0 0
    %723 = vmatpush1.bf16.msra.mxu0 0
    %724 = vmatprep.subr.bf16.mxu0 0
    %725 = vmatpush1.bf16.msra.mxu0 0
    %726 = vmatprep.subr.bf16.mxu0 0
    %727 = vmatpush1.bf16.msra.mxu0 0
    %728 = vmatprep.subr.bf16.mxu0 0
    %729 = vmatpush1.bf16.msra.mxu0 0
    %730 = vmatprep.subr.bf16.mxu0 0
    %731 = vmatpush1.bf16.msra.mxu0 0
    %732 = vmatprep.subr.bf16.mxu0 0
    %733 = vmatpush1.bf16.msra.mxu0 0
    %734 = vmatprep.mubr.bf16.mxu0 0
    %735 = vmatmul.mubr.bf16.gmra.mrb[0].mxu0 %v700
    %v736 = vpop.f32.mrb[0].mxu0
    %v737 = vadd.f32 0.0, %v736
    %v738 = vpop.f32.mrb[0].mxu0
    %v739 = vadd.f32 0.0, %v738
    %v740 = vpop.f32.mrb[0].mxu0
    %v741 = vadd.f32 0.0, %v740
    %v742 = vpop.f32.mrb[0].mxu0
    %v743 = vadd.f32 0.0, %v742
    %744 = vdwg.mxu0
    %v745 = vadd.f32 %v691, %v737
    %v746 = vadd.f32 %v692, %v739
    %v747 = vadd.f32 %v693, %v741
    %v748 = vadd.f32 %v694, %v743
    %v749 = vxor.u32 %v745, 2147483648
    %v750 = vxor.u32 %v747, 2147483648
    %v751 = vmul.f32 %v749, 1.442695
    %v752 = vpow.pop %v751
    %v753 = vmul.f32 %v750, 1.442695
    %v754 = vpow.pop %v753
    %v755 = vadd.f32 %v752, 1.0
    %v756 = vadd.f32 %v754, 1.0
    %v757 = vrcp.pop %v755
    %v758 = vmul.f32 1.0, %v757
    %v759 = vrcp.pop %v756
    %v760 = vmul.f32 1.0, %v759
    %v761 = vtanh.pop %v746
    %v762 = vtanh.pop %v748
    %v763 = vxor.u32 %v746, 2147483648
    %v764 = vxor.u32 %v748, 2147483648
    %v765 = vmul.f32 %v763, 1.442695
    %v766 = vpow.pop %v765
    %v767 = vmul.f32 %v764, 1.442695
    %v768 = vpow.pop %v767
    %v769 = vadd.f32 %v766, 1.0
    %v770 = vadd.f32 %v768, 1.0
    %v771 = vrcp.pop %v769
    %v772 = vmul.f32 1.0, %v771
    %v773 = vrcp.pop %v770
    %v774 = vmul.f32 1.0, %v773
    %v775 = vmul.f32 %v758, %v682
    %v776 = vmul.f32 %v760, %v683
    %v777 = vmul.f32 %v758, %v761
    %v778 = vmul.f32 %v760, %v762
    %781 = vrot.lane.b32.xlu0 %v777, 64
    %v782 = vpop.permute.xlu0 %781
    %783 = vrot.lane.b32.xlu0 %v778, 64
    %v784 = vpop.permute.xlu0 %783
    %v787 = vadd.f32 %v775, %v782
    %v788 = vadd.f32 %v776, %v784
    %v789 = vtanh.pop %v787
    %v790 = vtanh.pop %v788
    %v791 = vmul.f32 %v772, %v789
    %v792 = vmul.f32 %v774, %v790
    %s793 = smul.u32 6, 2
    %s794 = smul.addr %s793, 8
    %s795 = scalar_lea.vmem [#allocation2], %s794
    %v796 = vld [vmem:[%s795] sm:$0xff]
    %v797 = vld [vmem:[%s795 + $0x8] sm:$0xff]
    %v798 = vld [vmem:[%s795 + $0x10] sm:$0xff]
    %v799 = vld [vmem:[%s795 + $0x18] sm:$0xff]
    %v800 = vpack.c.bf16 %v792, %v791
    %802 = vrot.lane.b32.xlu0 %v800, 64
    %v803 = vpop.permute.xlu0 %802
    %v805 = vsel %vm251, %v803, 0
    %807 = vmatprep.subr.bf16.mxu0 %v466
    %808 = vmatpush1.bf16.msra.mxu0 %v465
    %809 = vmatprep.subr.bf16.mxu0 %v468
    %810 = vmatpush1.bf16.msra.mxu0 %v467
    %811 = vmatprep.subr.bf16.mxu0 %v470
    %812 = vmatpush1.bf16.msra.mxu0 %v469
    %813 = vmatprep.subr.bf16.mxu0 %v472
    %814 = vmatpush1.bf16.msra.mxu0 %v471
    %815 = vmatprep.subr.bf16.mxu0 0
    %816 = vmatpush1.bf16.msra.mxu0 0
    %817 = vmatprep.subr.bf16.mxu0 0
    %818 = vmatpush1.bf16.msra.mxu0 0
    %819 = vmatprep.subr.bf16.mxu0 0
    %820 = vmatpush1.bf16.msra.mxu0 0
    %821 = vmatprep.subr.bf16.mxu0 0
    %822 = vmatpush1.bf16.msra.mxu0 0
    %823 = vmatprep.subr.bf16.mxu0 0
    %824 = vmatpush1.bf16.msra.mxu0 0
    %825 = vmatprep.subr.bf16.mxu0 0
    %826 = vmatpush1.bf16.msra.mxu0 0
    %827 = vmatprep.subr.bf16.mxu0 0
    %828 = vmatpush1.bf16.msra.mxu0 0
    %829 = vmatprep.subr.bf16.mxu0 0
    %830 = vmatpush1.bf16.msra.mxu0 0
    %831 = vmatprep.subr.bf16.mxu0 0
    %832 = vmatpush1.bf16.msra.mxu0 0
    %833 = vmatprep.subr.bf16.mxu0 0
    %834 = vmatpush1.bf16.msra.mxu0 0
    %835 = vmatprep.subr.bf16.mxu0 0
    %836 = vmatpush1.bf16.msra.mxu0 0
    %837 = vmatprep.subr.bf16.mxu0 0
    %838 = vmatpush1.bf16.msra.mxu0 0
    %839 = vmatprep.mubr.bf16.mxu0 0
    %840 = vmatmul.mubr.bf16.gmra.mrb[0].mxu0 %v805
    %v841 = vpop.f32.mrb[0].mxu0
    %v842 = vadd.f32 0.0, %v841
    %v843 = vpop.f32.mrb[0].mxu0
    %v844 = vadd.f32 0.0, %v843
    %v845 = vpop.f32.mrb[0].mxu0
    %v846 = vadd.f32 0.0, %v845
    %v847 = vpop.f32.mrb[0].mxu0
    %v848 = vadd.f32 0.0, %v847
    %849 = vdwg.mxu0
    %v850 = vadd.f32 %v796, %v842
    %v851 = vadd.f32 %v797, %v844
    %v852 = vadd.f32 %v798, %v846
    %v853 = vadd.f32 %v799, %v848
    %v854 = vxor.u32 %v850, 2147483648
    %v855 = vxor.u32 %v852, 2147483648
    %v856 = vmul.f32 %v854, 1.442695
    %v857 = vpow.pop %v856
    %v858 = vmul.f32 %v855, 1.442695
    %v859 = vpow.pop %v858
    %v860 = vadd.f32 %v857, 1.0
    %v861 = vadd.f32 %v859, 1.0
    %v862 = vrcp.pop %v860
    %v863 = vmul.f32 1.0, %v862
    %v864 = vrcp.pop %v861
    %v865 = vmul.f32 1.0, %v864
    %v866 = vtanh.pop %v851
    %v867 = vtanh.pop %v853
    %v868 = vxor.u32 %v851, 2147483648
    %v869 = vxor.u32 %v853, 2147483648
    %v870 = vmul.f32 %v868, 1.442695
    %v871 = vpow.pop %v870
    %v872 = vmul.f32 %v869, 1.442695
    %v873 = vpow.pop %v872
    %v874 = vadd.f32 %v871, 1.0
    %v875 = vadd.f32 %v873, 1.0
    %v876 = vrcp.pop %v874
    %v877 = vmul.f32 1.0, %v876
    %v878 = vrcp.pop %v875
    %v879 = vmul.f32 1.0, %v878
    %v880 = vmul.f32 %v863, %v787
    %v881 = vmul.f32 %v865, %v788
    %v882 = vmul.f32 %v863, %v866
    %v883 = vmul.f32 %v865, %v867
    %886 = vrot.lane.b32.xlu0 %v882, 64
    %v887 = vpop.permute.xlu0 %886
    %888 = vrot.lane.b32.xlu0 %v883, 64
    %v889 = vpop.permute.xlu0 %888
    %v892 = vadd.f32 %v880, %v887
    %v893 = vadd.f32 %v881, %v889
    %v894 = vtanh.pop %v892
    %v895 = vtanh.pop %v893
    %v896 = vmul.f32 %v877, %v894
    %v897 = vmul.f32 %v879, %v895
    %s898 = smul.u32 8, 2
    %s899 = smul.addr %s898, 8
    %s900 = scalar_lea.vmem [#allocation2], %s899
    %v901 = vld [vmem:[%s900] sm:$0xff]
    %v902 = vld [vmem:[%s900 + $0x8] sm:$0xff]
    %v903 = vld [vmem:[%s900 + $0x10] sm:$0xff]
    %v904 = vld [vmem:[%s900 + $0x18] sm:$0xff]
    %v905 = vpack.c.bf16 %v897, %v896
    %907 = vrot.lane.b32.xlu0 %v905, 64
    %v908 = vpop.permute.xlu0 %907
    %v910 = vsel %vm251, %v908, 0
    %912 = vmatprep.subr.bf16.mxu0 %v466
    %913 = vmatpush1.bf16.msra.mxu0 %v465
    %914 = vmatprep.subr.bf16.mxu0 %v468
    %915 = vmatpush1.bf16.msra.mxu0 %v467
    %916 = vmatprep.subr.bf16.mxu0 %v470
    %917 = vmatpush1.bf16.msra.mxu0 %v469
    %918 = vmatprep.subr.bf16.mxu0 %v472
    %919 = vmatpush1.bf16.msra.mxu0 %v471
    %920 = vmatprep.subr.bf16.mxu0 0
    %921 = vmatpush1.bf16.msra.mxu0 0
    %922 = vmatprep.subr.bf16.mxu0 0
    %923 = vmatpush1.bf16.msra.mxu0 0
    %924 = vmatprep.subr.bf16.mxu0 0
    %925 = vmatpush1.bf16.msra.mxu0 0
    %926 = vmatprep.subr.bf16.mxu0 0
    %927 = vmatpush1.bf16.msra.mxu0 0
    %928 = vmatprep.subr.bf16.mxu0 0
    %929 = vmatpush1.bf16.msra.mxu0 0
    %930 = vmatprep.subr.bf16.mxu0 0
    %931 = vmatpush1.bf16.msra.mxu0 0
    %932 = vmatprep.subr.bf16.mxu0 0
    %933 = vmatpush1.bf16.msra.mxu0 0
    %934 = vmatprep.subr.bf16.mxu0 0
    %935 = vmatpush1.bf16.msra.mxu0 0
    %936 = vmatprep.subr.bf16.mxu0 0
    %937 = vmatpush1.bf16.msra.mxu0 0
    %938 = vmatprep.subr.bf16.mxu0 0
    %939 = vmatpush1.bf16.msra.mxu0 0
    %940 = vmatprep.subr.bf16.mxu0 0
    %941 = vmatpush1.bf16.msra.mxu0 0
    %942 = vmatprep.subr.bf16.mxu0 0
    %943 = vmatpush1.bf16.msra.mxu0 0
    %944 = vmatprep.mubr.bf16.mxu0 0
    %945 = vmatmul.mubr.bf16.gmra.mrb[0].mxu0 %v910
    %v946 = vpop.f32.mrb[0].mxu0
    %v947 = vadd.f32 0.0, %v946
    %v948 = vpop.f32.mrb[0].mxu0
    %v949 = vadd.f32 0.0, %v948
    %v950 = vpop.f32.mrb[0].mxu0
    %v951 = vadd.f32 0.0, %v950
    %v952 = vpop.f32.mrb[0].mxu0
    %v953 = vadd.f32 0.0, %v952
    %954 = vdwg.mxu0
    %v955 = vadd.f32 %v901, %v947
    %v956 = vadd.f32 %v902, %v949
    %v957 = vadd.f32 %v903, %v951
    %v958 = vadd.f32 %v904, %v953
    %v959 = vxor.u32 %v955, 2147483648
    %v960 = vxor.u32 %v957, 2147483648
    %v961 = vmul.f32 %v959, 1.442695
    %v962 = vpow.pop %v961
    %v963 = vmul.f32 %v960, 1.442695
    %v964 = vpow.pop %v963
    %v965 = vadd.f32 %v962, 1.0
    %v966 = vadd.f32 %v964, 1.0
    %v967 = vrcp.pop %v965
    %v968 = vmul.f32 1.0, %v967
    %v969 = vrcp.pop %v966
    %v970 = vmul.f32 1.0, %v969
    %v971 = vtanh.pop %v956
    %v972 = vtanh.pop %v958
    %v973 = vxor.u32 %v956, 2147483648
    %v974 = vxor.u32 %v958, 2147483648
    %v975 = vmul.f32 %v973, 1.442695
    %v976 = vpow.pop %v975
    %v977 = vmul.f32 %v974, 1.442695
    %v978 = vpow.pop %v977
    %v979 = vadd.f32 %v976, 1.0
    %v980 = vadd.f32 %v978, 1.0
    %v981 = vrcp.pop %v979
    %v982 = vmul.f32 1.0, %v981
    %v983 = vrcp.pop %v980
    %v984 = vmul.f32 1.0, %v983
    %v985 = vmul.f32 %v968, %v892
    %v986 = vmul.f32 %v970, %v893
    %v987 = vmul.f32 %v968, %v971
    %v988 = vmul.f32 %v970, %v972
    %991 = vrot.lane.b32.xlu0 %v987, 64
    %v992 = vpop.permute.xlu0 %991
    %993 = vrot.lane.b32.xlu0 %v988, 64
    %v994 = vpop.permute.xlu0 %993
    %v997 = vadd.f32 %v985, %v992
    %v998 = vadd.f32 %v986, %v994
    %v999 = vtanh.pop %v997
    %v1000 = vtanh.pop %v998
    %v1001 = vmul.f32 %v982, %v999
    %v1002 = vmul.f32 %v984, %v1000
    %s1003 = smul.u32 10, 2
    %s1004 = smul.addr %s1003, 8
    %s1005 = scalar_lea.vmem [#allocation2], %s1004
    %v1006 = vld [vmem:[%s1005] sm:$0xff]
    %v1007 = vld [vmem:[%s1005 + $0x8] sm:$0xff]
    %v1008 = vld [vmem:[%s1005 + $0x10] sm:$0xff]
    %v1009 = vld [vmem:[%s1005 + $0x18] sm:$0xff]
    %v1010 = vpack.c.bf16 %v1002, %v1001
    %1012 = vrot.lane.b32.xlu0 %v1010, 64
    %v1013 = vpop.permute.xlu0 %1012
    %v1015 = vsel %vm251, %v1013, 0
    %1017 = vmatprep.subr.bf16.mxu0 %v466
    %1018 = vmatpush1.bf16.msra.mxu0 %v465
    %1019 = vmatprep.subr.bf16.mxu0 %v468
    %1020 = vmatpush1.bf16.msra.mxu0 %v467
    %1021 = vmatprep.subr.bf16.mxu0 %v470
    %1022 = vmatpush1.bf16.msra.mxu0 %v469
    %1023 = vmatprep.subr.bf16.mxu0 %v472
    %1024 = vmatpush1.bf16.msra.mxu0 %v471
    %1025 = vmatprep.subr.bf16.mxu0 0
    %1026 = vmatpush1.bf16.msra.mxu0 0
    %1027 = vmatprep.subr.bf16.mxu0 0
    %1028 = vmatpush1.bf16.msra.mxu0 0
    %1029 = vmatprep.subr.bf16.mxu0 0
    %1030 = vmatpush1.bf16.msra.mxu0 0
    %1031 = vmatprep.subr.bf16.mxu0 0
    %1032 = vmatpush1.bf16.msra.mxu0 0
    %1033 = vmatprep.subr.bf16.mxu0 0
    %1034 = vmatpush1.bf16.msra.mxu0 0
    %1035 = vmatprep.subr.bf16.mxu0 0
    %1036 = vmatpush1.bf16.msra.mxu0 0
    %1037 = vmatprep.subr.bf16.mxu0 0
    %1038 = vmatpush1.bf16.msra.mxu0 0
    %1039 = vmatprep.subr.bf16.mxu0 0
    %1040 = vmatpush1.bf16.msra.mxu0 0
    %1041 = vmatprep.subr.bf16.mxu0 0
    %1042 = vmatpush1.bf16.msra.mxu0 0
    %1043 = vmatprep.subr.bf16.mxu0 0
    %1044 = vmatpush1.bf16.msra.mxu0 0
    %1045 = vmatprep.subr.bf16.mxu0 0
    %1046 = vmatpush1.bf16.msra.mxu0 0
    %1047 = vmatprep.subr.bf16.mxu0 0
    %1048 = vmatpush1.bf16.msra.mxu0 0
    %1049 = vmatprep.mubr.bf16.mxu0 0
    %1050 = vmatmul.mubr.bf16.gmra.mrb[0].mxu0 %v1015
    %v1051 = vpop.f32.mrb[0].mxu0
    %v1052 = vadd.f32 0.0, %v1051
    %v1053 = vpop.f32.mrb[0].mxu0
    %v1054 = vadd.f32 0.0, %v1053
    %v1055 = vpop.f32.mrb[0].mxu0
    %v1056 = vadd.f32 0.0, %v1055
    %v1057 = vpop.f32.mrb[0].mxu0
    %v1058 = vadd.f32 0.0, %v1057
    %1059 = vdwg.mxu0
    %v1060 = vadd.f32 %v1006, %v1052
    %v1061 = vadd.f32 %v1007, %v1054
    %v1062 = vadd.f32 %v1008, %v1056
    %v1063 = vadd.f32 %v1009, %v1058
    %v1064 = vxor.u32 %v1060, 2147483648
    %v1065 = vxor.u32 %v1062, 2147483648
    %v1066 = vmul.f32 %v1064, 1.442695
    %v1067 = vpow.pop %v1066
    %v1068 = vmul.f32 %v1065, 1.442695
    %v1069 = vpow.pop %v1068
    %v1070 = vadd.f32 %v1067, 1.0
    %v1071 = vadd.f32 %v1069, 1.0
    %v1072 = vrcp.pop %v1070
    %v1073 = vmul.f32 1.0, %v1072
    %v1074 = vrcp.pop %v1071
    %v1075 = vmul.f32 1.0, %v1074
    %v1076 = vtanh.pop %v1061
    %v1077 = vtanh.pop %v1063
    %v1078 = vxor.u32 %v1061, 2147483648
    %v1079 = vxor.u32 %v1063, 2147483648
    %v1080 = vmul.f32 %v1078, 1.442695
    %v1081 = vpow.pop %v1080
    %v1082 = vmul.f32 %v1079, 1.442695
    %v1083 = vpow.pop %v1082
    %v1084 = vadd.f32 %v1081, 1.0
    %v1085 = vadd.f32 %v1083, 1.0
    %v1086 = vrcp.pop %v1084
    %v1087 = vmul.f32 1.0, %v1086
    %v1088 = vrcp.pop %v1085
    %v1089 = vmul.f32 1.0, %v1088
    %v1090 = vmul.f32 %v1073, %v997
    %v1091 = vmul.f32 %v1075, %v998
    %v1092 = vmul.f32 %v1073, %v1076
    %v1093 = vmul.f32 %v1075, %v1077
    %1096 = vrot.lane.b32.xlu0 %v1092, 64
    %v1097 = vpop.permute.xlu0 %1096
    %1098 = vrot.lane.b32.xlu0 %v1093, 64
    %v1099 = vpop.permute.xlu0 %1098
    %v1102 = vadd.f32 %v1090, %v1097
    %v1103 = vadd.f32 %v1091, %v1099
    %v1104 = vtanh.pop %v1102
    %v1105 = vtanh.pop %v1103
    %v1106 = vmul.f32 %v1087, %v1104
    %v1107 = vmul.f32 %v1089, %v1105
    %s1108 = smul.u32 12, 2
    %s1109 = smul.addr %s1108, 8
    %s1110 = scalar_lea.vmem [#allocation2], %s1109
    %v1111 = vld [vmem:[%s1110] sm:$0xff]
    %v1112 = vld [vmem:[%s1110 + $0x8] sm:$0xff]
    %v1113 = vld [vmem:[%s1110 + $0x10] sm:$0xff]
    %v1114 = vld [vmem:[%s1110 + $0x18] sm:$0xff]
    %v1115 = vpack.c.bf16 %v1107, %v1106
    %1117 = vrot.lane.b32.xlu0 %v1115, 64
    %v1118 = vpop.permute.xlu0 %1117
    %v1120 = vsel %vm251, %v1118, 0
    %1122 = vmatprep.subr.bf16.mxu0 %v466
    %1123 = vmatpush1.bf16.msra.mxu0 %v465
    %1124 = vmatprep.subr.bf16.mxu0 %v468
    %1125 = vmatpush1.bf16.msra.mxu0 %v467
    %1126 = vmatprep.subr.bf16.mxu0 %v470
    %1127 = vmatpush1.bf16.msra.mxu0 %v469
    %1128 = vmatprep.subr.bf16.mxu0 %v472
    %1129 = vmatpush1.bf16.msra.mxu0 %v471
    %1130 = vmatprep.subr.bf16.mxu0 0
    %1131 = vmatpush1.bf16.msra.mxu0 0
    %1132 = vmatprep.subr.bf16.mxu0 0
    %1133 = vmatpush1.bf16.msra.mxu0 0
    %1134 = vmatprep.subr.bf16.mxu0 0
    %1135 = vmatpush1.bf16.msra.mxu0 0
    %1136 = vmatprep.subr.bf16.mxu0 0
    %1137 = vmatpush1.bf16.msra.mxu0 0
    %1138 = vmatprep.subr.bf16.mxu0 0
    %1139 = vmatpush1.bf16.msra.mxu0 0
    %1140 = vmatprep.subr.bf16.mxu0 0
    %1141 = vmatpush1.bf16.msra.mxu0 0
    %1142 = vmatprep.subr.bf16.mxu0 0
    %1143 = vmatpush1.bf16.msra.mxu0 0
    %1144 = vmatprep.subr.bf16.mxu0 0
    %1145 = vmatpush1.bf16.msra.mxu0 0
    %1146 = vmatprep.subr.bf16.mxu0 0
    %1147 = vmatpush1.bf16.msra.mxu0 0
    %1148 = vmatprep.subr.bf16.mxu0 0
    %1149 = vmatpush1.bf16.msra.mxu0 0
    %1150 = vmatprep.subr.bf16.mxu0 0
    %1151 = vmatpush1.bf16.msra.mxu0 0
    %1152 = vmatprep.subr.bf16.mxu0 0
    %1153 = vmatpush1.bf16.msra.mxu0 0
    %1154 = vmatprep.mubr.bf16.mxu0 0
    %1155 = vmatmul.mubr.bf16.gmra.mrb[0].mxu0 %v1120
    %v1156 = vpop.f32.mrb[0].mxu0
    %v1157 = vadd.f32 0.0, %v1156
    %v1158 = vpop.f32.mrb[0].mxu0
    %v1159 = vadd.f32 0.0, %v1158
    %v1160 = vpop.f32.mrb[0].mxu0
    %v1161 = vadd.f32 0.0, %v1160
    %v1162 = vpop.f32.mrb[0].mxu0
    %v1163 = vadd.f32 0.0, %v1162
    %1164 = vdwg.mxu0
    %v1165 = vadd.f32 %v1111, %v1157
    %v1166 = vadd.f32 %v1112, %v1159
    %v1167 = vadd.f32 %v1113, %v1161
    %v1168 = vadd.f32 %v1114, %v1163
    %v1169 = vxor.u32 %v1165, 2147483648
    %v1170 = vxor.u32 %v1167, 2147483648
    %v1171 = vmul.f32 %v1169, 1.442695
    %v1172 = vpow.pop %v1171
    %v1173 = vmul.f32 %v1170, 1.442695
    %v1174 = vpow.pop %v1173
    %v1175 = vadd.f32 %v1172, 1.0
    %v1176 = vadd.f32 %v1174, 1.0
    %v1177 = vrcp.pop %v1175
    %v1178 = vmul.f32 1.0, %v1177
    %v1179 = vrcp.pop %v1176
    %v1180 = vmul.f32 1.0, %v1179
    %v1181 = vtanh.pop %v1166
    %v1182 = vtanh.pop %v1168
    %v1183 = vxor.u32 %v1166, 2147483648
    %v1184 = vxor.u32 %v1168, 2147483648
    %v1185 = vmul.f32 %v1183, 1.442695
    %v1186 = vpow.pop %v1185
    %v1187 = vmul.f32 %v1184, 1.442695
    %v1188 = vpow.pop %v1187
    %v1189 = vadd.f32 %v1186, 1.0
    %v1190 = vadd.f32 %v1188, 1.0
    %v1191 = vrcp.pop %v1189
    %v1192 = vmul.f32 1.0, %v1191
    %v1193 = vrcp.pop %v1190
    %v1194 = vmul.f32 1.0, %v1193
    %v1195 = vmul.f32 %v1178, %v1102
    %v1196 = vmul.f32 %v1180, %v1103
    %v1197 = vmul.f32 %v1178, %v1181
    %v1198 = vmul.f32 %v1180, %v1182
    %1201 = vrot.lane.b32.xlu0 %v1197, 64
    %v1202 = vpop.permute.xlu0 %1201
    %1203 = vrot.lane.b32.xlu0 %v1198, 64
    %v1204 = vpop.permute.xlu0 %1203
    %v1207 = vadd.f32 %v1195, %v1202
    %v1208 = vadd.f32 %v1196, %v1204
    %v1209 = vtanh.pop %v1207
    %v1210 = vtanh.pop %v1208
    %v1211 = vmul.f32 %v1192, %v1209
    %v1212 = vmul.f32 %v1194, %v1210
    %s1213 = smul.u32 14, 2
    %s1214 = smul.addr %s1213, 8
    %s1215 = scalar_lea.vmem [#allocation2], %s1214
    %v1216 = vld [vmem:[%s1215] sm:$0xff]
    %v1217 = vld [vmem:[%s1215 + $0x8] sm:$0xff]
    %v1218 = vld [vmem:[%s1215 + $0x10] sm:$0xff]
    %v1219 = vld [vmem:[%s1215 + $0x18] sm:$0xff]
    %v1220 = vpack.c.bf16 %v1212, %v1211
    %1222 = vrot.lane.b32.xlu0 %v1220, 64
    %v1223 = vpop.permute.xlu0 %1222
    %v1225 = vsel %vm251, %v1223, 0
    %1227 = vmatprep.subr.bf16.mxu0 %v466
    %1228 = vmatpush1.bf16.msra.mxu0 %v465
    %1229 = vmatprep.subr.bf16.mxu0 %v468
    %1230 = vmatpush1.bf16.msra.mxu0 %v467
    %1231 = vmatprep.subr.bf16.mxu0 %v470
    %1232 = vmatpush1.bf16.msra.mxu0 %v469
    %1233 = vmatprep.subr.bf16.mxu0 %v472
    %1234 = vmatpush1.bf16.msra.mxu0 %v471
    %1235 = vmatprep.subr.bf16.mxu0 0
    %1236 = vmatpush1.bf16.msra.mxu0 0
    %1237 = vmatprep.subr.bf16.mxu0 0
    %1238 = vmatpush1.bf16.msra.mxu0 0
    %1239 = vmatprep.subr.bf16.mxu0 0
    %1240 = vmatpush1.bf16.msra.mxu0 0
    %1241 = vmatprep.subr.bf16.mxu0 0
    %1242 = vmatpush1.bf16.msra.mxu0 0
    %1243 = vmatprep.subr.bf16.mxu0 0
    %1244 = vmatpush1.bf16.msra.mxu0 0
    %1245 = vmatprep.subr.bf16.mxu0 0
    %1246 = vmatpush1.bf16.msra.mxu0 0
    %1247 = vmatprep.subr.bf16.mxu0 0
    %1248 = vmatpush1.bf16.msra.mxu0 0
    %1249 = vmatprep.subr.bf16.mxu0 0
    %1250 = vmatpush1.bf16.msra.mxu0 0
    %1251 = vmatprep.subr.bf16.mxu0 0
    %1252 = vmatpush1.bf16.msra.mxu0 0
    %1253 = vmatprep.subr.bf16.mxu0 0
    %1254 = vmatpush1.bf16.msra.mxu0 0
    %1255 = vmatprep.subr.bf16.mxu0 0
    %1256 = vmatpush1.bf16.msra.mxu0 0
    %1257 = vmatprep.subr.bf16.mxu0 0
    %1258 = vmatpush1.bf16.msra.mxu0 0
    %1259 = vmatprep.mubr.bf16.mxu0 0
    %1260 = vmatmul.mubr.bf16.gmra.mrb[0].mxu0 %v1225
    %v1261 = vpop.f32.mrb[0].mxu0
    %v1262 = vadd.f32 0.0, %v1261
    %v1263 = vpop.f32.mrb[0].mxu0
    %v1264 = vadd.f32 0.0, %v1263
    %v1265 = vpop.f32.mrb[0].mxu0
    %v1266 = vadd.f32 0.0, %v1265
    %v1267 = vpop.f32.mrb[0].mxu0
    %v1268 = vadd.f32 0.0, %v1267
    %1269 = vdwg.mxu0
    %v1270 = vadd.f32 %v1216, %v1262
    %v1271 = vadd.f32 %v1217, %v1264
    %v1272 = vadd.f32 %v1218, %v1266
    %v1273 = vadd.f32 %v1219, %v1268
    %v1274 = vxor.u32 %v1270, 2147483648
    %v1275 = vxor.u32 %v1272, 2147483648
    %v1276 = vmul.f32 %v1274, 1.442695
    %v1277 = vpow.pop %v1276
    %v1278 = vmul.f32 %v1275, 1.442695
    %v1279 = vpow.pop %v1278
    %v1280 = vadd.f32 %v1277, 1.0
    %v1281 = vadd.f32 %v1279, 1.0
    %v1282 = vrcp.pop %v1280
    %v1283 = vmul.f32 1.0, %v1282
    %v1284 = vrcp.pop %v1281
    %v1285 = vmul.f32 1.0, %v1284
    %v1286 = vtanh.pop %v1271
    %v1287 = vtanh.pop %v1273
    %v1288 = vxor.u32 %v1271, 2147483648
    %v1289 = vxor.u32 %v1273, 2147483648
    %v1290 = vmul.f32 %v1288, 1.442695
    %v1291 = vpow.pop %v1290
    %v1292 = vmul.f32 %v1289, 1.442695
    %v1293 = vpow.pop %v1292
    %v1294 = vadd.f32 %v1291, 1.0
    %v1295 = vadd.f32 %v1293, 1.0
    %v1296 = vrcp.pop %v1294
    %v1297 = vmul.f32 1.0, %v1296
    %v1298 = vrcp.pop %v1295
    %v1299 = vmul.f32 1.0, %v1298
    %v1300 = vmul.f32 %v1283, %v1207
    %v1301 = vmul.f32 %v1285, %v1208
    %v1302 = vmul.f32 %v1283, %v1286
    %v1303 = vmul.f32 %v1285, %v1287
    %1306 = vrot.lane.b32.xlu0 %v1302, 64
    %v1307 = vpop.permute.xlu0 %1306
    %1308 = vrot.lane.b32.xlu0 %v1303, 64
    %v1309 = vpop.permute.xlu0 %1308
    %v1312 = vadd.f32 %v1300, %v1307
    %v1313 = vadd.f32 %v1301, %v1309
    %v1314 = vtanh.pop %v1312
    %v1315 = vtanh.pop %v1313
    %v1316 = vmul.f32 %v1297, %v1314
    %v1317 = vmul.f32 %v1299, %v1315
    %1320 = vrot.lane.b32.xlu0 %v1316, 64
    %v1321 = vpop.permute.xlu0 %1320
    %1322 = vrot.lane.b32.xlu0 %v1317, 64
    %v1323 = vpop.permute.xlu0 %1322
    %1326 = vst.msk [vmem:[#allocation3] sm:$0xff] %vm251, %v1321
    %1327 = vst.msk [vmem:[#allocation3 + $0x8] sm:$0xff] %vm251, %v1323
    %1330 = vrot.lane.b32.xlu0 %v1312, 64
    %v1331 = vpop.permute.xlu0 %1330
    %1332 = vrot.lane.b32.xlu0 %v1313, 64
    %v1333 = vpop.permute.xlu0 %1332
    %1336 = vst.msk [vmem:[#allocation4] sm:$0xff] %vm251, %v1331
    %1337 = vst.msk [vmem:[#allocation4 + $0x8] sm:$0xff] %vm251, %v1333
    // Predicated region
    $region78: #{tpu_custom_call.1} parent=1 // pred_check
      %p1338 = pneg %p126
    $region79: #{tpu_custom_call.1} parent=1 // pred_check_branch
      %1340 = sbr.rel (%p1338) target = $region81
    $region80: #{tpu_custom_call.1} parent=1 // pred_region
      %v1341 = vld [vmem:[%s4] sm:$0xff]
      %v1342 = vld [vmem:[%s4 + $0x8] sm:$0xff]
      %v1343 = vld [vmem:[#allocation11] sm:$0xff]
      %v1344 = vld [vmem:[#allocation11 + $0x8] sm:$0xff]
      %v1345 = vld [vmem:[%s6] sm:$0x1]
      %v1347 = vlaneseq
      %v1348 = vshrl.u32 %v1347, 7
      %v1349 = vsub.s32 0, %v1348
      %v1350 = vrot.slane %v1345, %v1349
      %vm1352 = vcmask 130048
      %v1354 = vsel %vm1352, %v1341, 0
      %v1357 = vsel %vm1352, %v1342, 0
      %1359 = vmatprep.subr.mxu0 0.0
      %1360 = vmatpush1.msra.mxu0 %v1343
      %1361 = vmatprep.subr.mxu0 0.0
      %1362 = vmatpush1.msra.mxu0 %v1344
      %1363 = vmatprep.subr.mxu0 0.0
      %1364 = vmatpush1.msra.mxu0 0.0
      %1365 = vmatprep.subr.mxu0 0.0
      %1366 = vmatpush1.msra.mxu0 0.0
      %1367 = vmatprep.subr.mxu0 0.0
      %1368 = vmatpush1.msra.mxu0 0.0
      %1369 = vmatprep.subr.mxu0 0.0
      %1370 = vmatpush1.msra.mxu0 0.0
      %1371 = vmatprep.subr.mxu0 0.0
      %1372 = vmatpush1.msra.mxu0 0.0
      %1373 = vmatprep.subr.mxu0 0.0
      %1374 = vmatpush1.msra.mxu0 0.0
      %1375 = vmatprep.subr.mxu0 0.0
      %1376 = vmatpush1.msra.mxu0 0.0
      %1377 = vmatprep.subr.mxu0 0.0
      %1378 = vmatpush1.msra.mxu0 0.0
      %1379 = vmatprep.subr.mxu0 0.0
      %1380 = vmatpush1.msra.mxu0 0.0
      %1381 = vmatprep.subr.mxu0 0.0
      %1382 = vmatpush1.msra.mxu0 0.0
      %1383 = vmatprep.subr.mxu0 0.0
      %1384 = vmatpush1.msra.mxu0 0.0
      %1385 = vmatprep.subr.mxu0 0.0
      %1386 = vmatpush1.msra.mxu0 0.0
      %1387 = vmatprep.subr.mxu0 0.0
      %1388 = vmatpush1.msra.mxu0 0.0
      %1389 = vmatprep.subr.mxu0 0.0
      %1390 = vmatpush1.msra.mxu0 0.0
      %1391 = vmatprep.subr.mxu0 0.0
      %1392 = vmatpush1.msra.mxu0 0.0
      %1393 = vmatprep.subr.mxu0 0.0
      %1394 = vmatpush1.msra.mxu0 0.0
      %1395 = vmatprep.subr.mxu0 0.0
      %1396 = vmatpush1.msra.mxu0 0.0
      %1397 = vmatprep.subr.mxu0 0.0
      %1398 = vmatpush1.msra.mxu0 0.0
      %1399 = vmatprep.subr.mxu0 0.0
      %1400 = vmatpush1.msra.mxu0 0.0
      %1401 = vmatprep.subr.mxu0 0.0
      %1402 = vmatpush1.msra.mxu0 0.0
      %1403 = vmatprep.subr.mxu0 0.0
      %1404 = vmatpush1.msra.mxu0 0.0
      %1405 = vmatprep.subr.mxu0 0.0
      %1406 = vmatpush1.msra.mxu0 0.0
      %1407 = vmatprep.subr.mxu0 0.0
      %1408 = vmatpush1.msra.mxu0 0.0
      %1409 = vmatprep.subr.mxu0 0.0
      %1410 = vmatpush1.msra.mxu0 0.0
      %1411 = vmatprep.subr.mxu0 0.0
      %1412 = vmatpush1.msra.mxu0 0.0
      %1413 = vmatprep.subr.mxu0 0.0
      %1414 = vmatpush1.msra.mxu0 0.0
      %1415 = vmatprep.subr.mxu0 0.0
      %1416 = vmatpush1.msra.mxu0 0.0
      %1417 = vmatprep.subr.mxu0 0.0
      %1418 = vmatpush1.msra.mxu0 0.0
      %1419 = vmatprep.subr.mxu0 0.0
      %1420 = vmatpush1.msra.mxu0 0.0
      %1421 = vmatprep.subr.mxu0 0.0
      %1422 = vmatpush1.msra.mxu0 0.0
      %1423 = vmatprep.mubr.f32.mxu0 0.0
      %1424 = vmatmul.mubr.f32.gmra.mrb[0].mxu0 %v1354
      %v1425 = vpop.f32.mrb[0].mxu0
      %v1426 = vadd.f32 %v1350, %v1425
      %v1427 = vpop.f32.mrb[0].mxu0
      %1428 = vmatprep.mubr.f32.mxu0 0.0
      %1429 = vmatmul.mubr.f32.gmra.mrb[0].mxu0 %v1357
      %v1430 = vpop.f32.mrb[0].mxu0
      %v1431 = vadd.f32 %v1350, %v1430
      %v1432 = vpop.f32.mrb[0].mxu0
      %1433 = vdwg.mxu0
      %v1434 = vmax.f32 %v1426, 0.0
      %v1435 = vmax.f32 %v1431, 0.0
      %v1436 = vld [vmem:[#allocation13] sm:$0xff]
      %v1437 = vld [vmem:[#allocation13 + $0x8] sm:$0xff]
      %v1438 = vld [vmem:[#allocation13 + $0x10] sm:$0xff]
      %v1439 = vld [vmem:[#allocation13 + $0x18] sm:$0xff]
      %v1440 = vld [vmem:[#allocation13 + $0x20] sm:$0xff]
      %v1441 = vld [vmem:[#allocation13 + $0x28] sm:$0xff]
      %v1442 = vld [vmem:[#allocation13 + $0x30] sm:$0xff]
      %v1443 = vld [vmem:[#allocation13 + $0x38] sm:$0xff]
      %v1444 = vld [vmem:[#allocation14] sm:$0xff]
      %v1445 = vld [vmem:[#allocation14 + $0x8] sm:$0xff]
      %v1446 = vld [vmem:[#allocation14 + $0x10] sm:$0xff]
      %v1447 = vld [vmem:[#allocation14 + $0x18] sm:$0xff]
      %v1448 = vld [vmem:[#allocation14 + $0x20] sm:$0xff]
      %v1449 = vld [vmem:[#allocation14 + $0x28] sm:$0xff]
      %v1450 = vld [vmem:[#allocation14 + $0x30] sm:$0xff]
      %v1451 = vld [vmem:[#allocation14 + $0x38] sm:$0xff]
      %v1453 = vsel %vm251, %v1434, 0
      %v1456 = vsel %vm251, %v1435, 0
      %1458 = vmatprep.subr.mxu0 0.0
      %1459 = vmatpush1.msra.mxu0 %v1444
      %1460 = vmatprep.subr.mxu0 0.0
      %1461 = vmatpush1.msra.mxu0 %v1445
      %1462 = vmatprep.subr.mxu0 0.0
      %1463 = vmatpush1.msra.mxu0 %v1446
      %1464 = vmatprep.subr.mxu0 0.0
      %1465 = vmatpush1.msra.mxu0 %v1447
      %1466 = vmatprep.subr.mxu0 0.0
      %1467 = vmatpush1.msra.mxu0 %v1448
      %1468 = vmatprep.subr.mxu0 0.0
      %1469 = vmatpush1.msra.mxu0 %v1449
      %1470 = vmatprep.subr.mxu0 0.0
      %1471 = vmatpush1.msra.mxu0 %v1450
      %1472 = vmatprep.subr.mxu0 0.0
      %1473 = vmatpush1.msra.mxu0 %v1451
      %1474 = vmatprep.subr.mxu0 0.0
      %1475 = vmatpush1.msra.mxu0 0.0
      %1476 = vmatprep.subr.mxu0 0.0
      %1477 = vmatpush1.msra.mxu0 0.0
      %1478 = vmatprep.subr.mxu0 0.0
      %1479 = vmatpush1.msra.mxu0 0.0
      %1480 = vmatprep.subr.mxu0 0.0
      %1481 = vmatpush1.msra.mxu0 0.0
      %1482 = vmatprep.subr.mxu0 0.0
      %1483 = vmatpush1.msra.mxu0 0.0
      %1484 = vmatprep.subr.mxu0 0.0
      %1485 = vmatpush1.msra.mxu0 0.0
      %1486 = vmatprep.subr.mxu0 0.0
      %1487 = vmatpush1.msra.mxu0 0.0
      %1488 = vmatprep.subr.mxu0 0.0
      %1489 = vmatpush1.msra.mxu0 0.0
      %1490 = vmatprep.subr.mxu0 0.0
      %1491 = vmatpush1.msra.mxu0 0.0
      %1492 = vmatprep.subr.mxu0 0.0
      %1493 = vmatpush1.msra.mxu0 0.0
      %1494 = vmatprep.subr.mxu0 0.0
      %1495 = vmatpush1.msra.mxu0 0.0
      %1496 = vmatprep.subr.mxu0 0.0
      %1497 = vmatpush1.msra.mxu0 0.0
      %1498 = vmatprep.subr.mxu0 0.0
      %1499 = vmatpush1.msra.mxu0 0.0
      %1500 = vmatprep.subr.mxu0 0.0
      %1501 = vmatpush1.msra.mxu0 0.0
      %1502 = vmatprep.subr.mxu0 0.0
      %1503 = vmatpush1.msra.mxu0 0.0
      %1504 = vmatprep.subr.mxu0 0.0
      %1505 = vmatpush1.msra.mxu0 0.0
      %1506 = vmatprep.subr.mxu0 0.0
      %1507 = vmatpush1.msra.mxu0 0.0
      %1508 = vmatprep.subr.mxu0 0.0
      %1509 = vmatpush1.msra.mxu0 0.0
      %1510 = vmatprep.subr.mxu0 0.0
      %1511 = vmatpush1.msra.mxu0 0.0
      %1512 = vmatprep.subr.mxu0 0.0
      %1513 = vmatpush1.msra.mxu0 0.0
      %1514 = vmatprep.subr.mxu0 0.0
      %1515 = vmatpush1.msra.mxu0 0.0
      %1516 = vmatprep.subr.mxu0 0.0
      %1517 = vmatpush1.msra.mxu0 0.0
      %1518 = vmatprep.subr.mxu0 0.0
      %1519 = vmatpush1.msra.mxu0 0.0
      %1520 = vmatprep.subr.mxu0 0.0
      %1521 = vmatpush1.msra.mxu0 0.0
      %1522 = vmatprep.mubr.f32.mxu0 0.0
      %1523 = vmatmul.mubr.f32.gmra.mrb[0].mxu0 %v1453
      %v1524 = vpop.f32.mrb[0].mxu0
      %v1525 = vadd.f32 0.0, %v1524
      %v1526 = vpop.f32.mrb[0].mxu0
      %1527 = vmatprep.mubr.f32.mxu0 0.0
      %1528 = vmatmul.mubr.f32.gmra.mrb[0].mxu0 %v1456
      %v1529 = vpop.f32.mrb[0].mxu0
      %v1530 = vadd.f32 0.0, %v1529
      %v1531 = vpop.f32.mrb[0].mxu0
      %1532 = vdwg.mxu0
      %v1533 = vsel %vm251, %v1321, 0
      %v1535 = vsel %vm251, %v1323, 0
      %1537 = vmatprep.subr.mxu0 0.0
      %1538 = vmatpush1.msra.mxu0 %v1436
      %1539 = vmatprep.subr.mxu0 0.0
      %1540 = vmatpush1.msra.mxu0 %v1437
      %1541 = vmatprep.subr.mxu0 0.0
      %1542 = vmatpush1.msra.mxu0 %v1438
      %1543 = vmatprep.subr.mxu0 0.0
      %1544 = vmatpush1.msra.mxu0 %v1439
      %1545 = vmatprep.subr.mxu0 0.0
      %1546 = vmatpush1.msra.mxu0 %v1440
      %1547 = vmatprep.subr.mxu0 0.0
      %1548 = vmatpush1.msra.mxu0 %v1441
      %1549 = vmatprep.subr.mxu0 0.0
      %1550 = vmatpush1.msra.mxu0 %v1442
      %1551 = vmatprep.subr.mxu0 0.0
      %1552 = vmatpush1.msra.mxu0 %v1443
      %1553 = vmatprep.subr.mxu0 0.0
      %1554 = vmatpush1.msra.mxu0 0.0
      %1555 = vmatprep.subr.mxu0 0.0
      %1556 = vmatpush1.msra.mxu0 0.0
      %1557 = vmatprep.subr.mxu0 0.0
      %1558 = vmatpush1.msra.mxu0 0.0
      %1559 = vmatprep.subr.mxu0 0.0
      %1560 = vmatpush1.msra.mxu0 0.0
      %1561 = vmatprep.subr.mxu0 0.0
      %1562 = vmatpush1.msra.mxu0 0.0
      %1563 = vmatprep.subr.mxu0 0.0
      %1564 = vmatpush1.msra.mxu0 0.0
      %1565 = vmatprep.subr.mxu0 0.0
      %1566 = vmatpush1.msra.mxu0 0.0
      %1567 = vmatprep.subr.mxu0 0.0
      %1568 = vmatpush1.msra.mxu0 0.0
      %1569 = vmatprep.subr.mxu0 0.0
      %1570 = vmatpush1.msra.mxu0 0.0
      %1571 = vmatprep.subr.mxu0 0.0
      %1572 = vmatpush1.msra.mxu0 0.0
      %1573 = vmatprep.subr.mxu0 0.0
      %1574 = vmatpush1.msra.mxu0 0.0
      %1575 = vmatprep.subr.mxu0 0.0
      %1576 = vmatpush1.msra.mxu0 0.0
      %1577 = vmatprep.subr.mxu0 0.0
      %1578 = vmatpush1.msra.mxu0 0.0
      %1579 = vmatprep.subr.mxu0 0.0
      %1580 = vmatpush1.msra.mxu0 0.0
      %1581 = vmatprep.subr.mxu0 0.0
      %1582 = vmatpush1.msra.mxu0 0.0
      %1583 = vmatprep.subr.mxu0 0.0
      %1584 = vmatpush1.msra.mxu0 0.0
      %1585 = vmatprep.subr.mxu0 0.0
      %1586 = vmatpush1.msra.mxu0 0.0
      %1587 = vmatprep.subr.mxu0 0.0
      %1588 = vmatpush1.msra.mxu0 0.0
      %1589 = vmatprep.subr.mxu0 0.0
      %1590 = vmatpush1.msra.mxu0 0.0
      %1591 = vmatprep.subr.mxu0 0.0
      %1592 = vmatpush1.msra.mxu0 0.0
      %1593 = vmatprep.subr.mxu0 0.0
      %1594 = vmatpush1.msra.mxu0 0.0
      %1595 = vmatprep.subr.mxu0 0.0
      %1596 = vmatpush1.msra.mxu0 0.0
      %1597 = vmatprep.subr.mxu0 0.0
      %1598 = vmatpush1.msra.mxu0 0.0
      %1599 = vmatprep.subr.mxu0 0.0
      %1600 = vmatpush1.msra.mxu0 0.0
      %1601 = vmatprep.mubr.f32.mxu0 0.0
      %1602 = vmatmul.mubr.f32.gmra.mrb[0].mxu0 %v1533
      %v1603 = vpop.f32.mrb[0].mxu0
      %v1604 = vadd.f32 %v1525, %v1603
      %v1605 = vpop.f32.mrb[0].mxu0
      %1606 = vmatprep.mubr.f32.mxu0 0.0
      %1607 = vmatmul.mubr.f32.gmra.mrb[0].mxu0 %v1535
      %v1608 = vpop.f32.mrb[0].mxu0
      %v1609 = vadd.f32 %v1530, %v1608
      %v1610 = vpop.f32.mrb[0].mxu0
      %1611 = vdwg.mxu0
      %v1612 = vld [vmem:[%s9] sm:$0x1]
      %v1614 = vlaneseq
      %v1615 = vshrl.u32 %v1614, 7
      %v1616 = vsub.s32 0, %v1615
      %v1617 = vrot.slane %v1612, %v1616
      %v1619 = vadd.f32 %v1604, %v1617
      %v1620 = vadd.f32 %v1609, %v1617
      %v1621 = vmax.f32 %v1619, 0.0
      %v1622 = vmax.f32 %v1620, 0.0
      %v1623 = vld [vmem:[%s10] sm:$0x1]
      %v1625 = vlaneseq
      %v1626 = vshrl.u32 %v1625, 7
      %v1627 = vsub.s32 0, %v1626
      %v1628 = vrot.slane %v1623, %v1627
      %v1630 = vmul.f32 %v1621, %v1628
      %v1631 = vmul.f32 %v1622, %v1628
      %v1632 = vsel %vm251, %v1630, 0.0
      %1633 = vadd.xlane.f32.xlu0 %v1632
      %v1634 = vpop.xlane.xlu0 %1633
      %v1635 = vsel %vm251, %v1631, 0.0
      %1636 = vadd.xlane.f32.xlu0 %v1635
      %v1637 = vpop.xlane.xlu0 %1636
      %v1638 = vld [vmem:[#allocation5] sm:$0x1]
      %v1640 = vlaneseq
      %v1641 = vshrl.u32 %v1640, 7
      %v1642 = vsub.s32 0, %v1641
      %v1643 = vrot.slane %v1638, %v1642
      %v1645 = vadd.f32 %v1634, %v1643
      %v1646 = vadd.f32 %v1637, %v1643
      %vm1647 = vcmask 7168
      %1648 = vst.msk [vmem:[%s12] sm:$0xff] %vm1647, %v1645
      %1649 = vst.msk [vmem:[%s12 + $0x8] sm:$0xff] %vm1647, %v1646
    $region81: #{tpu_custom_call.1} parent=1 // pred_fallthru
      _
    // Predicated region
    $region82: #{tpu_custom_call.1} parent=1 // pred_check
      _
    $region83: #{tpu_custom_call.1} parent=1 // pred_check_branch
      %1651 = sbr.rel (0) target = $region85
    $region84: #{tpu_custom_call.1} parent=1 // pred_region
      _
    $region85: #{tpu_custom_call.1} parent=1 // pred_fallthru
      _
    // Predicated region
    $region86: #{tpu_custom_call.1} parent=1 // pred_check
      _
    $region87: #{tpu_custom_call.1} parent=1 // pred_check_branch
      %1653 = sbr.rel (0) target = $region89
    $region88: #{tpu_custom_call.1} parent=1 // pred_region
      _
    $region89: #{tpu_custom_call.1} parent=1 // pred_fallthru
      _
    %1654 = vsyncpa [#allocation7], 1
    %1655 = vsyncpa [#allocation9], 1
    %1656 = vsyncpa [#allocation12], 1
    %1657 = vsyncpa [#allocation15], 1

</llo_original>
